<compile_context>
chip_gen: v7x
topology: tpu7x:2x2x1
jax: 0.10.0
libtpu: 0.0.40
codegen_flags: <defaults>
</compile_context>

<pallas_src>
import functools
import math

import jax
import jax.numpy as jnp
from jax import lax
from jax.experimental import pallas as pl
from jax.experimental.pallas import tpu as pltpu


def _round_up(x, m):
    return (x + m - 1) // m * m


# ----------------------------------------------------------------------------
# Fused kernel: (dense -> gelu -> LayerNorm) cached per M-tile at j == 0, then
# bf16 decoder matmul + bias per (M-tile, vocab-tile).
# ----------------------------------------------------------------------------
def _lm_head_kernel(x_ref, w1_ref, b1_ref, lnw_ref, lnb_ref,
                    w2_ref, b2_ref, o_ref, t_ref, *, eps):
    # Transform this M-tile once (vocab axis is the inner "arbitrary" axis),
    # keep the result resident in VMEM scratch for all vocab tiles.
    @pl.when(pl.program_id(1) == 0)
    def _():
        # bf16 operands on the MXU, f32 accumulation.
        h = jnp.dot(x_ref[...], w1_ref[...], preferred_element_type=jnp.float32)
        h = h + b1_ref[...]                                        # f32 elementwise
        # exact (erf-based) gelu, matching transformers' `gelu`
        h = 0.5 * h * (1.0 + lax.erf(h * (1.0 / math.sqrt(2.0))))
        # LayerNorm over the hidden (last) axis, f32 elementwise
        mean = jnp.mean(h, axis=-1, keepdims=True)
        var = jnp.mean((h - mean) * (h - mean), axis=-1, keepdims=True)
        hn = (h - mean) * lax.rsqrt(var + eps)
        t_ref[...] = (hn * lnw_ref[...] + lnb_ref[...]).astype(t_ref.dtype)

    # Decoder GEMM: bf16 operands, f32 accumulation on the MXU.
    o_ref[...] = (
        jnp.dot(t_ref[...], w2_ref[...], preferred_element_type=jnp.float32)
        + b2_ref[...]
    ).astype(o_ref.dtype)


# ----------------------------------------------------------------------------
# One-time parameter preparation (hoisted out of the forward hot path):
# cast weights to their kernel dtypes and pad the vocab axis once.
# ----------------------------------------------------------------------------
def prepare_head_params(params, *, vocab_tile=1024):
    H = params["dense_w"].shape[0]
    V = params["decoder_w"].shape[1]

    vocab_tile = _round_up(max(vocab_tile, 128), 128)
    tn = min(vocab_tile, _round_up(V, 128))
    Vp = _round_up(V, tn)

    w2 = params["decoder_w"].astype(jnp.bfloat16)        # (H, V) bf16 weight stream
    b2 = params["decoder_b"].astype(jnp.float32)         # (V,)
    if Vp != V:
        w2 = jnp.pad(w2, ((0, 0), (0, Vp - V)))
        b2 = jnp.pad(b2, (0, Vp - V))

    return {
        "w1": params["dense_w"].astype(jnp.bfloat16),     # (H, H) bf16
        "b1": params["dense_b"].reshape(1, H).astype(jnp.float32),
        "lnw": params["ln_w"].reshape(1, H).astype(jnp.float32),
        "lnb": params["ln_b"].reshape(1, H).astype(jnp.float32),
        "w2": w2,                                         # (H, Vp) bf16
        "b2": b2.reshape(1, Vp),                          # (1, Vp) f32
        "vocab_size": V,
        "vocab_tile": tn,
    }


# ----------------------------------------------------------------------------
# Forward wrapper
# ----------------------------------------------------------------------------
def bert_lm_prediction_head(x, prep, *, eps=1e-12, m_tile=512,
                            out_dtype=jnp.float32,
                            vmem_limit_bytes=48 * 1024 * 1024):
    """x: [B, S, H] -> logits [B, S, V] (f32 by default).

    `prep` comes from prepare_head_params (weights already cast/padded once).
    m_tile=512 is a good default for v5e; 1024 recommended on v6e/v7x (still
    ~20-22 MiB of VMEM at H=1024, under the 48 MiB budget).  Pass
    out_dtype=jnp.bfloat16 to cut logits writeback traffic if the consumer
    tolerates bf16 logits.
    """
    B, S, H = x.shape
    M = B * S
    xm = x.reshape(M, H).astype(jnp.bfloat16)   # bf16 activation stream (MXU-native)

    w1, b1, lnw, lnb = prep["w1"], prep["b1"], prep["lnw"], prep["lnb"]
    w2, b2 = prep["w2"], prep["b2"]
    V = prep["vocab_size"]
    Vp = w2.shape[1]
    tn = prep["vocab_tile"]

    # tm: multiple of 16 (bf16 sublane packing); cap so there are >= 2 M tiles
    # whenever M > 16 so the "parallel" axis splits across both v7x TensorCores.
    m_tile = _round_up(max(m_tile, 16), 16)
    two_tile_cap = _round_up(max(-(-M // 2), 16), 16)
    tm = min(m_tile, two_tile_cap)
    Mp = _round_up(M, tm)
    if Mp != M:
        xm = jnp.pad(xm, ((0, Mp - M), (0, 0)))

    grid = (Mp // tm, Vp // tn)

    def call(const_mode):
        kw = {} if const_mode is None else {"pipeline_mode": const_mode}
        return pl.pallas_call(
            functools.partial(_lm_head_kernel, eps=eps),
            out_shape=jax.ShapeDtypeStruct((Mp, Vp), out_dtype),
            grid_spec=pltpu.PrefetchScalarGridSpec(
                num_scalar_prefetch=0,
                grid=grid,
                in_specs=[
                    pl.BlockSpec((tm, H), lambda i, j: (i, 0)),       # x tile (const over j)
                    pl.BlockSpec((H, H), lambda i, j: (0, 0), **kw),  # W1 (grid-constant)
                    pl.BlockSpec((1, H), lambda i, j: (0, 0), **kw),  # b1
                    pl.BlockSpec((1, H), lambda i, j: (0, 0), **kw),  # LN weight
                    pl.BlockSpec((1, H), lambda i, j: (0, 0), **kw),  # LN bias
                    pl.BlockSpec((H, tn), lambda i, j: (0, j)),       # decoder weight stream
                    pl.BlockSpec((1, tn), lambda i, j: (0, j)),       # decoder bias tile
                ],
                out_specs=pl.BlockSpec((tm, tn), lambda i, j: (i, j)),
                scratch_shapes=[pltpu.VMEM((tm, H), jnp.bfloat16)],   # cached transform tile
            ),
            compiler_params=pltpu.CompilerParams(
                # M tiles independent -> megacore sharding; vocab axis carries
                # the scratch-cached transform -> arbitrary.
                dimension_semantics=("parallel", "arbitrary"),
                vmem_limit_bytes=vmem_limit_bytes,
            ),
        )(xm, w1, b1, lnw, lnb, w2, b2)

    try:
        # Grid-constant inputs never change block index -> a single pipeline
        # buffer saves ~2 MiB of VMEM (better spent on larger tm / tn).
        logits = call(pl.Buffered(1))
    except Exception:
        # Fallback if this jax version rejects pipeline_mode=Buffered(1).
        logits = call(None)

    return logits[:M, :V].reshape(B, S, V)


# ----------------------------------------------------------------------------
# Deterministic parameter init (synthetic; shapes from the module __init__)
# ----------------------------------------------------------------------------
def init_params(key, hidden_size, vocab_size):
    k1, k2, k3 = jax.random.split(key, 3)
    scale = 1.0 / math.sqrt(hidden_size)
    return {
        # nn.Linear(H, H): y = x @ W^T + b ; stored transposed -> (H, H)
        "dense_w": jax.random.uniform(
            k1, (hidden_size, hidden_size), jnp.float32, -scale, scale
        ),
        "dense_b": jax.random.uniform(
            k2, (hidden_size,), jnp.float32, -scale, scale
        ),
        # LayerNorm(H)
        "ln_w": jnp.ones((hidden_size,), jnp.float32),
        "ln_b": jnp.zeros((hidden_size,), jnp.float32),
        # nn.Linear(H, V, bias=False): stored transposed -> (H, V)
        "decoder_w": jax.random.uniform(
            k3, (hidden_size, vocab_size), jnp.float32, -scale, scale
        ),
        # self.bias = nn.Parameter(torch.zeros(vocab_size))
        "decoder_b": jnp.zeros((vocab_size,), jnp.float32),
    }


if __name__ == "__main__":
    # Small demo shapes that still exercise multi-tile M, multi-tile vocab and
    # vocab padding (V = 300 is not a multiple of 128).
    B, S, H, V = 2, 24, 32, 300

    key = jax.random.PRNGKey(0)
    kx, kp = jax.random.split(key)
    x = jax.random.normal(kx, (B, S, H), dtype=jnp.float32)
    params = init_params(kp, H, V)

    # One-time weight cast / vocab padding (hoisted out of the forward).
    prep = prepare_head_params(params, vocab_tile=128)
    out = bert_lm_prediction_head(x, prep, eps=1e-12, m_tile=16)
    out = jax.block_until_ready(out)

    # ---- pure-JAX reference (same bf16-operand GEMMs, f32 accumulation) ----
    xm = x.reshape(B * S, H)
    h = jnp.dot(xm.astype(jnp.bfloat16), params["dense_w"].astype(jnp.bfloat16),
                preferred_element_type=jnp.float32) + params["dense_b"]
    h = 0.5 * h * (1.0 + lax.erf(h / math.sqrt(2.0)))
    mu = h.mean(-1, keepdims=True)
    var = ((h - mu) ** 2).mean(-1, keepdims=True)
    t = (h - mu) / jnp.sqrt(var + 1e-12) * params["ln_w"] + params["ln_b"]
    ref = (
        jnp.dot(t.astype(jnp.bfloat16), params["decoder_w"].astype(jnp.bfloat16),
                preferred_element_type=jnp.float32)
        + params["decoder_b"]
    ).reshape(B, S, V)

    assert out.shape == (B, S, V)
    assert jnp.allclose(out, ref, atol=2e-2, rtol=2e-2), "mismatch vs reference"

    print("KERNEL_OK")
</pallas_src>

<mosaic_0001>
module attributes {stable_mosaic.version = 11 : i64} {
  func.func @_lm_head_kernel(%arg0: i32, %arg1: i32, %arg2: memref<16x32xbf16, #tpu.memory_space<vmem>>, %arg3: memref<32x32xbf16, #tpu.memory_space<vmem>>, %arg4: memref<1x32xf32, #tpu.memory_space<vmem>>, %arg5: memref<1x32xf32, #tpu.memory_space<vmem>>, %arg6: memref<1x32xf32, #tpu.memory_space<vmem>>, %arg7: memref<32x128xbf16, #tpu.memory_space<vmem>>, %arg8: memref<1x128xf32, #tpu.memory_space<vmem>>, %arg9: memref<16x128xf32, #tpu.memory_space<vmem>>, %arg10: memref<16x32xbf16, #tpu.memory_space<vmem>>) attributes {dimension_semantics = [#tpu.dimension_semantics<parallel>, #tpu.dimension_semantics<arbitrary>], iteration_bounds = array<i64: 3, 3>, scalar_prefetch = 0 : i64, scratch_operands = 1 : i64, tpu.core_type = #tpu.core_type<tc>, window_params = [{transform_indices = @transform_0, window_bounds = array<i64: 16, 32>}, {pipeline_mode = #tpu.pipeline_mode<synchronous>, transform_indices = @transform_1, window_bounds = array<i64: 32, 32>}, {pipeline_mode = #tpu.pipeline_mode<synchronous>, transform_indices = @transform_2, window_bounds = array<i64: 1, 32>}, {pipeline_mode = #tpu.pipeline_mode<synchronous>, transform_indices = @transform_3, window_bounds = array<i64: 1, 32>}, {pipeline_mode = #tpu.pipeline_mode<synchronous>, transform_indices = @transform_4, window_bounds = array<i64: 1, 32>}, {transform_indices = @transform_5, window_bounds = array<i64: 32, 128>}, {transform_indices = @transform_6, window_bounds = array<i64: 1, 128>}, {transform_indices = @transform_7, window_bounds = array<i64: 16, 128>}]} {
    %c0_i32 = arith.constant 0 : i32
    %0 = arith.cmpi eq, %arg1, %c0_i32 : i32
    %1 = arith.extui %0 : i1 to i32
    %c0_i32_0 = arith.constant 0 : i32
    %2 = arith.cmpi ne, %1, %c0_i32_0 : i32
    scf.if %2 {
      %c0_8 = arith.constant 0 : index
      %c0_9 = arith.constant 0 : index
      %10 = vector.load %arg2[%c0_8, %c0_9] : memref<16x32xbf16, #tpu.memory_space<vmem>>, vector<16x32xbf16>
      %c0_10 = arith.constant 0 : index
      %c0_11 = arith.constant 0 : index
      %11 = vector.load %arg3[%c0_10, %c0_11] : memref<32x32xbf16, #tpu.memory_space<vmem>>, vector<32x32xbf16>
      %cst_12 = arith.constant dense<0.000000e+00> : vector<16x32xf32>
      %12 = tpu.matmul %10, %11, %cst_12 {dimension_numbers = #tpu.dot_dimension_numbers<[1], [0], [0], [1], [0, 0, 1, 1], [], []>} : vector<16x32xbf16>, vector<32x32xbf16>, vector<16x32xf32> -> vector<16x32xf32>
      %c0_13 = arith.constant 0 : index
      %c0_14 = arith.constant 0 : index
      %13 = vector.load %arg4[%c0_13, %c0_14] : memref<1x32xf32, #tpu.memory_space<vmem>>, vector<1x32xf32>
      %14 = vector.broadcast %13 : vector<1x32xf32> to vector<16x32xf32>
      %15 = arith.addf %12, %14 : vector<16x32xf32>
      %cst_15 = arith.constant 5.000000e-01 : f32
      %16 = vector.broadcast %cst_15 : f32 to vector<16x32xf32>
      %17 = arith.mulf %16, %15 : vector<16x32xf32>
      %cst_16 = arith.constant 0.707106769 : f32
      %18 = vector.broadcast %cst_16 : f32 to vector<16x32xf32>
      %19 = arith.mulf %15, %18 : vector<16x32xf32>
      %20 = math.erf %19 : vector<16x32xf32>
      %cst_17 = arith.constant 1.000000e+00 : f32
      %21 = vector.broadcast %cst_17 : f32 to vector<16x32xf32>
      %22 = arith.addf %21, %20 : vector<16x32xf32>
      %23 = arith.mulf %17, %22 : vector<16x32xf32>
      %cst_18 = arith.constant dense<0.000000e+00> : vector<16xf32>
      %24 = vector.multi_reduction <add>, %23, %cst_18 [1] : vector<16x32xf32> to vector<16xf32>
      %25 = vector.shape_cast %24 : vector<16xf32> to vector<16x1xf32>
      %cst_19 = arith.constant 3.200000e+01 : f32
      %26 = vector.broadcast %cst_19 : f32 to vector<16x1xf32>
      %27 = arith.divf %25, %26 : vector<16x1xf32>
      %28 = vector.broadcast %27 : vector<16x1xf32> to vector<16x32xf32>
      %29 = arith.subf %23, %28 : vector<16x32xf32>
      %30 = vector.broadcast %27 : vector<16x1xf32> to vector<16x32xf32>
      %31 = arith.subf %23, %30 : vector<16x32xf32>
      %32 = arith.mulf %29, %31 : vector<16x32xf32>
      %cst_20 = arith.constant dense<0.000000e+00> : vector<16xf32>
      %33 = vector.multi_reduction <add>, %32, %cst_20 [1] : vector<16x32xf32> to vector<16xf32>
      %34 = vector.shape_cast %33 : vector<16xf32> to vector<16x1xf32>
      %cst_21 = arith.constant 3.200000e+01 : f32
      %35 = vector.broadcast %cst_21 : f32 to vector<16x1xf32>
      %36 = arith.divf %34, %35 : vector<16x1xf32>
      %37 = vector.broadcast %27 : vector<16x1xf32> to vector<16x32xf32>
      %38 = arith.subf %23, %37 : vector<16x32xf32>
      %cst_22 = arith.constant 9.99999996E-13 : f32
      %39 = vector.broadcast %cst_22 : f32 to vector<16x1xf32>
      %40 = arith.addf %36, %39 : vector<16x1xf32>
      %41 = math.rsqrt %40 : vector<16x1xf32>
      %42 = vector.broadcast %41 : vector<16x1xf32> to vector<16x32xf32>
      %43 = arith.mulf %38, %42 : vector<16x32xf32>
      %c0_23 = arith.constant 0 : index
      %c0_24 = arith.constant 0 : index
      %44 = vector.load %arg5[%c0_23, %c0_24] : memref<1x32xf32, #tpu.memory_space<vmem>>, vector<1x32xf32>
      %45 = vector.broadcast %44 : vector<1x32xf32> to vector<16x32xf32>
      %46 = arith.mulf %43, %45 : vector<16x32xf32>
      %c0_25 = arith.constant 0 : index
      %c0_26 = arith.constant 0 : index
      %47 = vector.load %arg6[%c0_25, %c0_26] : memref<1x32xf32, #tpu.memory_space<vmem>>, vector<1x32xf32>
      %48 = vector.broadcast %47 : vector<1x32xf32> to vector<16x32xf32>
      %49 = arith.addf %46, %48 : vector<16x32xf32>
      %50 = arith.truncf %49 : vector<16x32xf32> to vector<16x32xbf16>
      %c0_27 = arith.constant 0 : index
      %c0_28 = arith.constant 0 : index
      %51 = vector.load %arg10[%c0_27, %c0_28] : memref<16x32xbf16, #tpu.memory_space<vmem>>, vector<16x32xbf16>
      tpu.vector_store %arg10[%c0_27, %c0_28], %50 {strides = array<i32>} : memref<16x32xbf16, #tpu.memory_space<vmem>>, vector<16x32xbf16>,
    } else {
    }
    %c0 = arith.constant 0 : index
    %c0_1 = arith.constant 0 : index
    %3 = vector.load %arg10[%c0, %c0_1] : memref<16x32xbf16, #tpu.memory_space<vmem>>, vector<16x32xbf16>
    %c0_2 = arith.constant 0 : index
    %c0_3 = arith.constant 0 : index
    %4 = vector.load %arg7[%c0_2, %c0_3] : memref<32x128xbf16, #tpu.memory_space<vmem>>, vector<32x128xbf16>
    %cst = arith.constant dense<0.000000e+00> : vector<16x128xf32>
    %5 = tpu.matmul %3, %4, %cst {dimension_numbers = #tpu.dot_dimension_numbers<[1], [0], [0], [1], [0, 0, 1, 1], [], []>} : vector<16x32xbf16>, vector<32x128xbf16>, vector<16x128xf32> -> vector<16x128xf32>
    %c0_4 = arith.constant 0 : index
    %c0_5 = arith.constant 0 : index
    %6 = vector.load %arg8[%c0_4, %c0_5] : memref<1x128xf32, #tpu.memory_space<vmem>>, vector<1x128xf32>
    %7 = vector.broadcast %6 : vector<1x128xf32> to vector<16x128xf32>
    %8 = arith.addf %5, %7 : vector<16x128xf32>
    %c0_6 = arith.constant 0 : index
    %c0_7 = arith.constant 0 : index
    %9 = vector.load %arg9[%c0_6, %c0_7] : memref<16x128xf32, #tpu.memory_space<vmem>>, vector<16x128xf32>
    tpu.vector_store %arg9[%c0_6, %c0_7], %8 {strides = array<i32>} : memref<16x128xf32, #tpu.memory_space<vmem>>, vector<16x128xf32>,
    return
  }
  func.func @transform_0(%arg0: i32, %arg1: i32) -> (i32, i32) {
    %c0_i32 = arith.constant 0 : i32
    %c0_i32_0 = arith.constant 0 : i32
    return %arg0, %c0_i32 : i32, i32
  }
  func.func @transform_1(%arg0: i32, %arg1: i32) -> (i32, i32) {
    %c0_i32 = arith.constant 0 : i32
    %c0_i32_0 = arith.constant 0 : i32
    %c0_i32_1 = arith.constant 0 : i32
    return %c0_i32, %c0_i32_0 : i32, i32
  }
  func.func @transform_2(%arg0: i32, %arg1: i32) -> (i32, i32) {
    %c0_i32 = arith.constant 0 : i32
    %c0_i32_0 = arith.constant 0 : i32
    %c0_i32_1 = arith.constant 0 : i32
    return %c0_i32, %c0_i32_0 : i32, i32
  }
  func.func @transform_3(%arg0: i32, %arg1: i32) -> (i32, i32) {
    %c0_i32 = arith.constant 0 : i32
    %c0_i32_0 = arith.constant 0 : i32
    %c0_i32_1 = arith.constant 0 : i32
    return %c0_i32, %c0_i32_0 : i32, i32
  }
  func.func @transform_4(%arg0: i32, %arg1: i32) -> (i32, i32) {
    %c0_i32 = arith.constant 0 : i32
    %c0_i32_0 = arith.constant 0 : i32
    %c0_i32_1 = arith.constant 0 : i32
    return %c0_i32, %c0_i32_0 : i32, i32
  }
  func.func @transform_5(%arg0: i32, %arg1: i32) -> (i32, i32) {
    %c0_i32 = arith.constant 0 : i32
    %c0_i32_0 = arith.constant 0 : i32
    return %c0_i32, %arg1 : i32, i32
  }
  func.func @transform_6(%arg0: i32, %arg1: i32) -> (i32, i32) {
    %c0_i32 = arith.constant 0 : i32
    %c0_i32_0 = arith.constant 0 : i32
    return %c0_i32, %arg1 : i32, i32
  }
  func.func @transform_7(%arg0: i32, %arg1: i32) -> (i32, i32) {
    %c0_i32 = arith.constant 0 : i32
    return %arg0, %arg1 : i32, i32
  }
}

module attributes {stable_mosaic.version = 11 : i64} {
  func.func @_lm_head_kernel(%arg0: i32, %arg1: i32, %arg2: memref<16x32xbf16, #tpu.memory_space<vmem>>, %arg3: memref<32x32xbf16, #tpu.memory_space<vmem>>, %arg4: memref<1x32xf32, #tpu.memory_space<vmem>>, %arg5: memref<1x32xf32, #tpu.memory_space<vmem>>, %arg6: memref<1x32xf32, #tpu.memory_space<vmem>>, %arg7: memref<32x128xbf16, #tpu.memory_space<vmem>>, %arg8: memref<1x128xf32, #tpu.memory_space<vmem>>, %arg9: memref<16x128xf32, #tpu.memory_space<vmem>>, %arg10: memref<16x32xbf16, #tpu.memory_space<vmem>>) attributes {dimension_semantics = [#tpu.dimension_semantics<parallel>, #tpu.dimension_semantics<arbitrary>], iteration_bounds = array<i64: 3, 3>, scalar_prefetch = 0 : i64, scratch_operands = 1 : i64, tpu.core_type = #tpu.core_type<tc>, window_params = [{transform_indices = @transform_0, window_bounds = array<i64: 16, 32>}, {pipeline_mode = #tpu.pipeline_mode<synchronous>, transform_indices = @transform_1, window_bounds = array<i64: 32, 32>}, {pipeline_mode = #tpu.pipeline_mode<synchronous>, transform_indices = @transform_2, window_bounds = array<i64: 1, 32>}, {pipeline_mode = #tpu.pipeline_mode<synchronous>, transform_indices = @transform_3, window_bounds = array<i64: 1, 32>}, {pipeline_mode = #tpu.pipeline_mode<synchronous>, transform_indices = @transform_4, window_bounds = array<i64: 1, 32>}, {transform_indices = @transform_5, window_bounds = array<i64: 32, 128>}, {transform_indices = @transform_6, window_bounds = array<i64: 1, 128>}, {transform_indices = @transform_7, window_bounds = array<i64: 16, 128>}]} {
    %c0_i32 = arith.constant 0 : i32
    %0 = arith.cmpi eq, %arg1, %c0_i32 : i32
    %1 = arith.extui %0 : i1 to i32
    %c0_i32_0 = arith.constant 0 : i32
    %2 = arith.cmpi ne, %1, %c0_i32_0 : i32
    scf.if %2 {
      %c0_8 = arith.constant 0 : index
      %c0_9 = arith.constant 0 : index
      %10 = vector.load %arg2[%c0_8, %c0_9] : memref<16x32xbf16, #tpu.memory_space<vmem>>, vector<16x32xbf16>
      %c0_10 = arith.constant 0 : index
      %c0_11 = arith.constant 0 : index
      %11 = vector.load %arg3[%c0_10, %c0_11] : memref<32x32xbf16, #tpu.memory_space<vmem>>, vector<32x32xbf16>
      %cst_12 = arith.constant dense<0.000000e+00> : vector<16x32xf32>
      %12 = tpu.matmul %10, %11, %cst_12 {dimension_numbers = #tpu.dot_dimension_numbers<[1], [0], [0], [1], [0, 0, 1, 1], [], []>} : vector<16x32xbf16>, vector<32x32xbf16>, vector<16x32xf32> -> vector<16x32xf32>
      %c0_13 = arith.constant 0 : index
      %c0_14 = arith.constant 0 : index
      %13 = vector.load %arg4[%c0_13, %c0_14] : memref<1x32xf32, #tpu.memory_space<vmem>>, vector<1x32xf32>
      %14 = vector.broadcast %13 : vector<1x32xf32> to vector<16x32xf32>
      %15 = arith.addf %12, %14 : vector<16x32xf32>
      %cst_15 = arith.constant 5.000000e-01 : f32
      %16 = vector.broadcast %cst_15 : f32 to vector<16x32xf32>
      %17 = arith.mulf %16, %15 : vector<16x32xf32>
      %cst_16 = arith.constant 0.707106769 : f32
      %18 = vector.broadcast %cst_16 : f32 to vector<16x32xf32>
      %19 = arith.mulf %15, %18 : vector<16x32xf32>
      %20 = math.erf %19 : vector<16x32xf32>
      %cst_17 = arith.constant 1.000000e+00 : f32
      %21 = vector.broadcast %cst_17 : f32 to vector<16x32xf32>
      %22 = arith.addf %21, %20 : vector<16x32xf32>
      %23 = arith.mulf %17, %22 : vector<16x32xf32>
      %cst_18 = arith.constant dense<0.000000e+00> : vector<16xf32>
      %24 = vector.multi_reduction <add>, %23, %cst_18 [1] : vector<16x32xf32> to vector<16xf32>
      %25 = vector.shape_cast %24 : vector<16xf32> to vector<16x1xf32>
      %cst_19 = arith.constant 3.200000e+01 : f32
      %26 = vector.broadcast %cst_19 : f32 to vector<16x1xf32>
      %27 = arith.divf %25, %26 : vector<16x1xf32>
      %28 = vector.broadcast %27 : vector<16x1xf32> to vector<16x32xf32>
      %29 = arith.subf %23, %28 : vector<16x32xf32>
      %30 = vector.broadcast %27 : vector<16x1xf32> to vector<16x32xf32>
      %31 = arith.subf %23, %30 : vector<16x32xf32>
      %32 = arith.mulf %29, %31 : vector<16x32xf32>
      %cst_20 = arith.constant dense<0.000000e+00> : vector<16xf32>
      %33 = vector.multi_reduction <add>, %32, %cst_20 [1] : vector<16x32xf32> to vector<16xf32>
      %34 = vector.shape_cast %33 : vector<16xf32> to vector<16x1xf32>
      %cst_21 = arith.constant 3.200000e+01 : f32
      %35 = vector.broadcast %cst_21 : f32 to vector<16x1xf32>
      %36 = arith.divf %34, %35 : vector<16x1xf32>
      %37 = vector.broadcast %27 : vector<16x1xf32> to vector<16x32xf32>
      %38 = arith.subf %23, %37 : vector<16x32xf32>
      %cst_22 = arith.constant 9.99999996E-13 : f32
      %39 = vector.broadcast %cst_22 : f32 to vector<16x1xf32>
      %40 = arith.addf %36, %39 : vector<16x1xf32>
      %41 = math.rsqrt %40 : vector<16x1xf32>
      %42 = vector.broadcast %41 : vector<16x1xf32> to vector<16x32xf32>
      %43 = arith.mulf %38, %42 : vector<16x32xf32>
      %c0_23 = arith.constant 0 : index
      %c0_24 = arith.constant 0 : index
      %44 = vector.load %arg5[%c0_23, %c0_24] : memref<1x32xf32, #tpu.memory_space<vmem>>, vector<1x32xf32>
      %45 = vector.broadcast %44 : vector<1x32xf32> to vector<16x32xf32>
      %46 = arith.mulf %43, %45 : vector<16x32xf32>
      %c0_25 = arith.constant 0 : index
      %c0_26 = arith.constant 0 : index
      %47 = vector.load %arg6[%c0_25, %c0_26] : memref<1x32xf32, #tpu.memory_space<vmem>>, vector<1x32xf32>
      %48 = vector.broadcast %47 : vector<1x32xf32> to vector<16x32xf32>
      %49 = arith.addf %46, %48 : vector<16x32xf32>
      %50 = arith.truncf %49 : vector<16x32xf32> to vector<16x32xbf16>
      %c0_27 = arith.constant 0 : index
      %c0_28 = arith.constant 0 : index
      %51 = vector.load %arg10[%c0_27, %c0_28] : memref<16x32xbf16, #tpu.memory_space<vmem>>, vector<16x32xbf16>
      tpu.vector_store %arg10[%c0_27, %c0_28], %50 {strides = array<i32>} : memref<16x32xbf16, #tpu.memory_space<vmem>>, vector<16x32xbf16>,
    } else {
    }
    %c0 = arith.constant 0 : index
    %c0_1 = arith.constant 0 : index
    %3 = vector.load %arg10[%c0, %c0_1] : memref<16x32xbf16, #tpu.memory_space<vmem>>, vector<16x32xbf16>
    %c0_2 = arith.constant 0 : index
    %c0_3 = arith.constant 0 : index
    %4 = vector.load %arg7[%c0_2, %c0_3] : memref<32x128xbf16, #tpu.memory_space<vmem>>, vector<32x128xbf16>
    %cst = arith.constant dense<0.000000e+00> : vector<16x128xf32>
    %5 = tpu.matmul %3, %4, %cst {dimension_numbers = #tpu.dot_dimension_numbers<[1], [0], [0], [1], [0, 0, 1, 1], [], []>} : vector<16x32xbf16>, vector<32x128xbf16>, vector<16x128xf32> -> vector<16x128xf32>
    %c0_4 = arith.constant 0 : index
    %c0_5 = arith.constant 0 : index
    %6 = vector.load %arg8[%c0_4, %c0_5] : memref<1x128xf32, #tpu.memory_space<vmem>>, vector<1x128xf32>
    %7 = vector.broadcast %6 : vector<1x128xf32> to vector<16x128xf32>
    %8 = arith.addf %5, %7 : vector<16x128xf32>
    %c0_6 = arith.constant 0 : index
    %c0_7 = arith.constant 0 : index
    %9 = vector.load %arg9[%c0_6, %c0_7] : memref<16x128xf32, #tpu.memory_space<vmem>>, vector<16x128xf32>
    tpu.vector_store %arg9[%c0_6, %c0_7], %8 {strides = array<i32>} : memref<16x128xf32, #tpu.memory_space<vmem>>, vector<16x128xf32>,
    return
  }
  func.func @transform_0(%arg0: i32, %arg1: i32) -> (i32, i32) {
    %c0_i32 = arith.constant 0 : i32
    %c0_i32_0 = arith.constant 0 : i32
    return %arg0, %c0_i32 : i32, i32
  }
  func.func @transform_1(%arg0: i32, %arg1: i32) -> (i32, i32) {
    %c0_i32 = arith.constant 0 : i32
    %c0_i32_0 = arith.constant 0 : i32
    %c0_i32_1 = arith.constant 0 : i32
    return %c0_i32, %c0_i32_0 : i32, i32
  }
  func.func @transform_2(%arg0: i32, %arg1: i32) -> (i32, i32) {
    %c0_i32 = arith.constant 0 : i32
    %c0_i32_0 = arith.constant 0 : i32
    %c0_i32_1 = arith.constant 0 : i32
    return %c0_i32, %c0_i32_0 : i32, i32
  }
  func.func @transform_3(%arg0: i32, %arg1: i32) -> (i32, i32) {
    %c0_i32 = arith.constant 0 : i32
    %c0_i32_0 = arith.constant 0 : i32
    %c0_i32_1 = arith.constant 0 : i32
    return %c0_i32, %c0_i32_0 : i32, i32
  }
  func.func @transform_4(%arg0: i32, %arg1: i32) -> (i32, i32) {
    %c0_i32 = arith.constant 0 : i32
    %c0_i32_0 = arith.constant 0 : i32
    %c0_i32_1 = arith.constant 0 : i32
    return %c0_i32, %c0_i32_0 : i32, i32
  }
  func.func @transform_5(%arg0: i32, %arg1: i32) -> (i32, i32) {
    %c0_i32 = arith.constant 0 : i32
    %c0_i32_0 = arith.constant 0 : i32
    return %c0_i32, %arg1 : i32, i32
  }
  func.func @transform_6(%arg0: i32, %arg1: i32) -> (i32, i32) {
    %c0_i32 = arith.constant 0 : i32
    %c0_i32_0 = arith.constant 0 : i32
    return %c0_i32, %arg1 : i32, i32
  }
  func.func @transform_7(%arg0: i32, %arg1: i32) -> (i32, i32) {
    %c0_i32 = arith.constant 0 : i32
    return %arg0, %arg1 : i32, i32
  }
}

</mosaic_0001>

<llo_original>
// kernel: tpu_custom_call.1
$region0: #{tpu_custom_call.1}
  #allocation0 [shape = 'u32[]', space=smem, size = 0x4, offset = 0x4, fixed_abs, tag = 'smem constant byte address 0x4 - core index']
  #allocation1 [shape = 'u32[144,128]{1,0:T(1,128)}', space=vmem, size = 0x12000, scoped, tag = 'internal scratch']
  #allocation2 [shape = 'bf16[16,32]{1,0:T(16,128)(2,1)}', space=vmem, size = 0x1000, scoped, tag = 'scratch operand']
  %s0 = inlined_call_operand.vmem [shape: bf16[48,32], index: 0, kind: input, shape index: {}]
  %s1 = inlined_call_operand.hbm [shape: bf16[32,32], index: 1, kind: input, shape index: {}]
  %s2 = inlined_call_operand.vmem [shape: f32[1,32], index: 2, kind: input, shape index: {}]
  %s3 = inlined_call_operand.vmem [shape: f32[1,32], index: 3, kind: input, shape index: {}]
  %s4 = inlined_call_operand.vmem [shape: f32[1,32], index: 4, kind: input, shape index: {}]
  %s5 = inlined_call_operand.vmem [shape: bf16[32,384], index: 5, kind: input, shape index: {}]
  %s6 = inlined_call_operand.vmem [shape: f32[1,384], index: 6, kind: input, shape index: {}]
  %s7 = inlined_call_operand.hbm [shape: f32[48,384], index: 7, kind: output, shape index: {}]
  %s8 = sld [smem:[#allocation0]]
  $region110: #{tpu_custom_call.1} parent=0
    _
  %s10 = ssub.s32 1, %s8
  %s11 = scalar_select 0, %s10, %s8
  $region1: #{tpu_custom_call.1} parent=0
    #allocation3 [shape = 'u8[8192]{0}', space=vmem, size = 0x2000, scoped, tag = 'input window, operand 1, single buffered']
    #allocation4 [shape = 's32[2]{0}', space=sflag, size = 0x8, scoped, tag = 'scoped memory for tpu_custom_call.1']
    #allocation5 [shape = 's32[2]{0}', space=sflag, size = 0x8, scoped, tag = 'scoped memory for tpu_custom_call.1']
    #allocation6 [shape = 'u8[16384]{0}', space=vmem, size = 0x4000, scoped, tag = 'input window, operand 5']
    #allocation7 [shape = 'u8[16384]{0}', space=vmem, size = 0x4000, scoped, tag = 'output window, operand 0']
    %12 = vsyncpa [#allocation4], 0
    %13 = vsyncpa [#allocation5], 0
    %s14 = scalar_lea.sflag [#allocation5], 1
    %15 = vsyncpa %s14, 0
    loop: start=0, step=1, limit=11
    $region2: #{tpu_custom_call.1} parent=1 // loop_pre_header
      _
    $region3: #{tpu_custom_call.1} parent=1 // loop_header
      %s17 = sphi 0, %s21
      %p18 = scmp.ge.s32.totalorder %s17, 11
      %s24 = sphi 0, %s36
      %s25 = sphi 0, %s32
      %s26 = sphi 0, %s24
      %s27 = sphi 0, %s25
      %s28 = sphi 0, %s26
      %s29 = sphi 0, %s27
      %s39 = sphi 0, %s41
      %s42 = sphi 0, %s39
      %s43 = sphi 0, %s42
      %s59 = sphi 0, %s43
      %s63 = sphi 0, %s63
      %s65 = sphi 0, %s63
      %s66 = sphi 0, %s65
      %s80 = sphi 0, %s66
      %s84 = sphi 0, %s84
      %s86 = sphi 0, %s84
      %s87 = sphi 0, %s86
      %s101 = sphi 0, %s87
      %s105 = sphi 0, %s105
      %s107 = sphi 0, %s105
      %s108 = sphi 0, %s107
      %s122 = sphi 0, %s108
      %s126 = sphi 0, %s126
      %s128 = sphi 0, %s126
      %s129 = sphi 0, %s128
      %s143 = sphi 0, %s129
      %s149 = sphi 0, %s151
      %s152 = sphi 0, %s149
      %s153 = sphi 0, %s152
      %s169 = sphi 0, %s153
      %s175 = sphi 0, %s177
      %s178 = sphi 0, %s175
      %s179 = sphi 0, %s178
      %s195 = sphi 0, %s179
      %s203 = sphi 0, %s205
      %s206 = sphi 0, %s203
      %s207 = sphi 0, %s206
      %s223 = sphi 0, %s207
    $region4: #{tpu_custom_call.1} parent=1 // loop_header_branch
      %20 = sbr.rel (%p18) target = $region8
    $region5: #{tpu_custom_call.1} parent=1 // loop_body
      %s22 = ssub.s32 %s17, 1
      %s23 = ssub.s32 %s17, 2
      %s30 = sadd.s32 1, %s25
      %p31 = scmp.ge.s32.totalorder %s30, 3
      %s32 = scalar_select %p31, 0, %s30
      %s33 = sadd.s32 1, %s24
      %s34 = scalar_select %p31, %s33, %s24
      %p35 = scmp.ge.s32.totalorder %s34, 3
      %s36 = scalar_select %p35, 0, %s34
      %s37 = ssub.s32 %s24, %s36
      %p38 = scmp.eq.s32.totalorder %s37, 0
      %s40 = sadd.s32 %s39, 1
      %s41 = scalar_select %p38, %s39, %s40
      %p44 = pneg %p38
      %p45 = scmp.eq.s32.totalorder %s17, 8
      %p46 = por %p44, %p45
      %p47 = scmp.ne.s32.totalorder %s39, %s42
      %p48 = scmp.eq.s32.totalorder %s17, 0
      %p49 = por %p47, %p48
      %p50 = scmp.ne.s32.totalorder %s39, %s42
      %p51 = scmp.eq.s32.totalorder %s22, 8
      %p52 = por %p50, %p51
      %p53 = scmp.ne.s32.totalorder %s42, %s43
      %p54 = scmp.eq.s32.totalorder %s22, 0
      %p55 = por %p53, %p54
      %p56 = scmp.ne.s32.totalorder %s42, %s43
      %p57 = scmp.eq.s32.totalorder %s23, 8
      %p58 = por %p56, %p57
      %p60 = scmp.ne.s32.totalorder %s43, %s59
      %p61 = scmp.eq.s32.totalorder %s23, 0
      %p62 = por %p60, %p61
      %s64 = sadd.s32 %s63, 1
      %p67 = scmp.eq.s32.totalorder %s17, 8
      %p68 = scmp.ne.s32.totalorder %s63, %s65
      %p69 = scmp.eq.s32.totalorder %s17, 0
      %p70 = por %p68, %p69
      %p71 = scmp.ne.s32.totalorder %s63, %s65
      %p72 = scmp.eq.s32.totalorder %s22, 8
      %p73 = por %p71, %p72
      %p74 = scmp.ne.s32.totalorder %s65, %s66
      %p75 = scmp.eq.s32.totalorder %s22, 0
      %p76 = por %p74, %p75
      %p77 = scmp.ne.s32.totalorder %s65, %s66
      %p78 = scmp.eq.s32.totalorder %s23, 8
      %p79 = por %p77, %p78
      %p81 = scmp.ne.s32.totalorder %s66, %s80
      %p82 = scmp.eq.s32.totalorder %s23, 0
      %p83 = por %p81, %p82
      %s85 = sadd.s32 %s84, 1
      %p88 = scmp.eq.s32.totalorder %s17, 8
      %p89 = scmp.ne.s32.totalorder %s84, %s86
      %p90 = scmp.eq.s32.totalorder %s17, 0
      %p91 = por %p89, %p90
      %p92 = scmp.ne.s32.totalorder %s84, %s86
      %p93 = scmp.eq.s32.totalorder %s22, 8
      %p94 = por %p92, %p93
      %p95 = scmp.ne.s32.totalorder %s86, %s87
      %p96 = scmp.eq.s32.totalorder %s22, 0
      %p97 = por %p95, %p96
      %p98 = scmp.ne.s32.totalorder %s86, %s87
      %p99 = scmp.eq.s32.totalorder %s23, 8
      %p100 = por %p98, %p99
      %p102 = scmp.ne.s32.totalorder %s87, %s101
      %p103 = scmp.eq.s32.totalorder %s23, 0
      %p104 = por %p102, %p103
      %s106 = sadd.s32 %s105, 1
      %p109 = scmp.eq.s32.totalorder %s17, 8
      %p110 = scmp.ne.s32.totalorder %s105, %s107
      %p111 = scmp.eq.s32.totalorder %s17, 0
      %p112 = por %p110, %p111
      %p113 = scmp.ne.s32.totalorder %s105, %s107
      %p114 = scmp.eq.s32.totalorder %s22, 8
      %p115 = por %p113, %p114
      %p116 = scmp.ne.s32.totalorder %s107, %s108
      %p117 = scmp.eq.s32.totalorder %s22, 0
      %p118 = por %p116, %p117
      %p119 = scmp.ne.s32.totalorder %s107, %s108
      %p120 = scmp.eq.s32.totalorder %s23, 8
      %p121 = por %p119, %p120
      %p123 = scmp.ne.s32.totalorder %s108, %s122
      %p124 = scmp.eq.s32.totalorder %s23, 0
      %p125 = por %p123, %p124
      %s127 = sadd.s32 %s126, 1
      %p130 = scmp.eq.s32.totalorder %s17, 8
      %p131 = scmp.ne.s32.totalorder %s126, %s128
      %p132 = scmp.eq.s32.totalorder %s17, 0
      %p133 = por %p131, %p132
      %p134 = scmp.ne.s32.totalorder %s126, %s128
      %p135 = scmp.eq.s32.totalorder %s22, 8
      %p136 = por %p134, %p135
      %p137 = scmp.ne.s32.totalorder %s128, %s129
      %p138 = scmp.eq.s32.totalorder %s22, 0
      %p139 = por %p137, %p138
      %p140 = scmp.ne.s32.totalorder %s128, %s129
      %p141 = scmp.eq.s32.totalorder %s23, 8
      %p142 = por %p140, %p141
      %p144 = scmp.ne.s32.totalorder %s129, %s143
      %p145 = scmp.eq.s32.totalorder %s23, 0
      %p146 = por %p144, %p145
      %s147 = ssub.s32 %s25, %s32
      %p148 = scmp.eq.s32.totalorder %s147, 0
      %s150 = sadd.s32 %s149, 1
      %s151 = scalar_select %p148, %s149, %s150
      %p154 = pneg %p148
      %p155 = scmp.eq.s32.totalorder %s17, 8
      %p156 = por %p154, %p155
      %p157 = scmp.ne.s32.totalorder %s149, %s152
      %p158 = scmp.eq.s32.totalorder %s17, 0
      %p159 = por %p157, %p158
      %p160 = scmp.ne.s32.totalorder %s149, %s152
      %p161 = scmp.eq.s32.totalorder %s22, 8
      %p162 = por %p160, %p161
      %p163 = scmp.ne.s32.totalorder %s152, %s153
      %p164 = scmp.eq.s32.totalorder %s22, 0
      %p165 = por %p163, %p164
      %p166 = scmp.ne.s32.totalorder %s152, %s153
      %p167 = scmp.eq.s32.totalorder %s23, 8
      %p168 = por %p166, %p167
      %p170 = scmp.ne.s32.totalorder %s153, %s169
      %p171 = scmp.eq.s32.totalorder %s23, 0
      %p172 = por %p170, %p171
      %s173 = ssub.s32 %s25, %s32
      %p174 = scmp.eq.s32.totalorder %s173, 0
      %s176 = sadd.s32 %s175, 1
      %s177 = scalar_select %p174, %s175, %s176
      %p180 = pneg %p174
      %p181 = scmp.eq.s32.totalorder %s17, 8
      %p182 = por %p180, %p181
      %p183 = scmp.ne.s32.totalorder %s175, %s178
      %p184 = scmp.eq.s32.totalorder %s17, 0
      %p185 = por %p183, %p184
      %p186 = scmp.ne.s32.totalorder %s175, %s178
      %p187 = scmp.eq.s32.totalorder %s22, 8
      %p188 = por %p186, %p187
      %p189 = scmp.ne.s32.totalorder %s178, %s179
      %p190 = scmp.eq.s32.totalorder %s22, 0
      %p191 = por %p189, %p190
      %p192 = scmp.ne.s32.totalorder %s178, %s179
      %p193 = scmp.eq.s32.totalorder %s23, 8
      %p194 = por %p192, %p193
      %p196 = scmp.ne.s32.totalorder %s179, %s195
      %p197 = scmp.eq.s32.totalorder %s23, 0
      %p198 = por %p196, %p197
      %s199 = ssub.s32 %s24, %s36
      %s200 = ssub.s32 %s25, %s32
      %s201 = sor.u32 %s199, %s200
      %p202 = scmp.eq.s32.totalorder %s201, 0
      %s204 = sadd.s32 %s203, 1
      %s205 = scalar_select %p202, %s203, %s204
      %p208 = pneg %p202
      %p209 = scmp.eq.s32.totalorder %s17, 8
      %p210 = por %p208, %p209
      %p211 = scmp.ne.s32.totalorder %s203, %s206
      %p212 = scmp.eq.s32.totalorder %s17, 0
      %p213 = por %p211, %p212
      %p214 = scmp.ne.s32.totalorder %s203, %s206
      %p215 = scmp.eq.s32.totalorder %s22, 8
      %p216 = por %p214, %p215
      %p217 = scmp.ne.s32.totalorder %s206, %s207
      %p218 = scmp.eq.s32.totalorder %s22, 0
      %p219 = por %p217, %p218
      %p220 = scmp.ne.s32.totalorder %s206, %s207
      %p221 = scmp.eq.s32.totalorder %s23, 8
      %p222 = por %p220, %p221
      %p224 = scmp.ne.s32.totalorder %s207, %s223
      %p225 = scmp.eq.s32.totalorder %s23, 0
      %p226 = por %p224, %p225
      %p227 = scmp.le.s32.totalorder 1, %s17
      %p228 = scmp.lt.s32.totalorder %s17, 10
      %p229 = pnand %p227, %p228
      %p230 = pneg %p229
      // Predicated region
      $region9: #{tpu_custom_call.1} parent=5 // pred_check
        _
      $region10: #{tpu_custom_call.1} parent=5 // pred_check_branch
        %232 = sbr.rel (%p229) target = $region12
      $region11: #{tpu_custom_call.1} parent=5 // pred_region
        %s233 = ssub.s32 %s17, 1
        // Predicated region
        $region13: #{tpu_custom_call.1} parent=11 // pred_check
          %p234 = pneg %p76
        $region14: #{tpu_custom_call.1} parent=11 // pred_check_branch
          %236 = sbr.rel (%p234) target = $region16
        $region15: #{tpu_custom_call.1} parent=11 // pred_region
          %s238 = ssub.s32 256, 256
          %239 = vsyncadd [#allocation4], %s238
          %s240 = sshll.u32 [#allocation3], 4
          %s241 = int_to_ptr.vmem [resolvable:$true] %s240
          %246 = dma.hbm_to_vmem [thread:$0]  %s1, 256, %s241, [#allocation4], 64, 64, 4
        $region16: #{tpu_custom_call.1} parent=11 // pred_fallthru
          _
        // Predicated region
        $region17: #{tpu_custom_call.1} parent=11 // pred_check
          %p247 = pneg %p97
        $region18: #{tpu_custom_call.1} parent=11 // pred_check_branch
          %249 = sbr.rel (%p247) target = $region20
        $region19: #{tpu_custom_call.1} parent=11 // pred_region
          _
        $region20: #{tpu_custom_call.1} parent=11 // pred_fallthru
          _
        // Predicated region
        $region21: #{tpu_custom_call.1} parent=11 // pred_check
          %p250 = pneg %p118
        $region22: #{tpu_custom_call.1} parent=11 // pred_check_branch
          %252 = sbr.rel (%p250) target = $region24
        $region23: #{tpu_custom_call.1} parent=11 // pred_region
          _
        $region24: #{tpu_custom_call.1} parent=11 // pred_fallthru
          _
        // Predicated region
        $region25: #{tpu_custom_call.1} parent=11 // pred_check
          %p253 = pneg %p139
        $region26: #{tpu_custom_call.1} parent=11 // pred_check_branch
          %255 = sbr.rel (%p253) target = $region28
        $region27: #{tpu_custom_call.1} parent=11 // pred_region
          _
        $region28: #{tpu_custom_call.1} parent=11 // pred_fallthru
          _
      $region12: #{tpu_custom_call.1} parent=5 // pred_fallthru
        _
      %p256 = scmp.lt.s32.totalorder %s17, 9
      // Predicated region
      $region29: #{tpu_custom_call.1} parent=5 // pred_check
        %p257 = pneg %p256
      $region30: #{tpu_custom_call.1} parent=5 // pred_check_branch
        %259 = sbr.rel (%p257) target = $region32
      $region31: #{tpu_custom_call.1} parent=5 // pred_region
        // Predicated region
        $region33: #{tpu_custom_call.1} parent=31 // pred_check
          %p260 = pneg %p49
        $region34: #{tpu_custom_call.1} parent=31 // pred_check_branch
          %262 = sbr.rel (%p260) target = $region36
        $region35: #{tpu_custom_call.1} parent=31 // pred_region
          %s263 = smul.u32 2, %s24
          %p264 = scmp.lt.s32.totalorder %s263, 5
          %s265 = scalar_select %p264, %s263, 5
          %s266 = smul.addr %s265, 4
          %s267 = scalar_lea.vmem %s0, %s266
          %s268 = smul.u32 2, %s24
        $region36: #{tpu_custom_call.1} parent=31 // pred_fallthru
          _
        // Predicated region
        $region37: #{tpu_custom_call.1} parent=31 // pred_check
          %p269 = pneg %p159
        $region38: #{tpu_custom_call.1} parent=31 // pred_check_branch
          %271 = sbr.rel (%p269) target = $region40
        $region39: #{tpu_custom_call.1} parent=31 // pred_region
          %s272 = sand.u32 %s149, 1
          %s273 = sand.u32 %s149, 1
          %s274 = smul.addr %s273, 16
          %s275 = scalar_lea.vmem [#allocation6], %s274
          %s276 = smul.addr %s25, 4
          %s277 = scalar_lea.vmem %s5, %s276
          // Predicated region
          $region41: #{tpu_custom_call.1} parent=39 // pred_check
            _
          $region42: #{tpu_custom_call.1} parent=39 // pred_check_branch
            %279 = sbr.rel (0) target = $region44
          $region43: #{tpu_custom_call.1} parent=39 // pred_region
            // Predicated region
            $region45: #{tpu_custom_call.1} parent=43 // pred_check
              _
            $region46: #{tpu_custom_call.1} parent=43 // pred_check_branch
              %281 = sbr.rel target = $region48
            $region47: #{tpu_custom_call.1} parent=43 // pred_region
              // Predicated region
              $region60: #{tpu_custom_call.1} parent=47 // pred_check
                _
              $region61: #{tpu_custom_call.1} parent=47 // pred_check_branch
                %302 = sbr.rel (0) target = $region63
              $region62: #{tpu_custom_call.1} parent=47 // pred_region
                loop: start=0, step=1, limit=1
                $region64: #{tpu_custom_call.1} parent=62 // loop_pre_header
                  _
                $region65: #{tpu_custom_call.1} parent=62 // loop_header
                  %s304 = sphi 0, %s308
                  %p305 = scmp.ge.s32.totalorder %s304, 1
                  %s309 = sphi %s277, %s277
                  %s310 = sphi %s275, %s275
                $region66: #{tpu_custom_call.1} parent=62 // loop_header_branch
                  %307 = sbr.rel (%p305) target = $region70
                $region67: #{tpu_custom_call.1} parent=62 // loop_body
                  _
                $region68: #{tpu_custom_call.1} parent=62 // loop_footer
                  %s308 = sadd.s32 1, %s304
                $region69: #{tpu_custom_call.1} parent=62 // loop_footer_branch
                  %303 = sbr.rel target = $region65
                $region70: #{tpu_custom_call.1} parent=62 // loop_exit
                  _
                loop: start=0, step=1, limit=1
                $region71: #{tpu_custom_call.1} parent=62 // loop_pre_header
                  _
                $region72: #{tpu_custom_call.1} parent=62 // loop_header
                  %s313 = sphi 0, %s317
                  %p314 = scmp.ge.s32.totalorder %s313, 1
                  %s318 = sphi %s277, %s277
                  %s319 = sphi %s275, %s275
                $region73: #{tpu_custom_call.1} parent=62 // loop_header_branch
                  %316 = sbr.rel (%p314) target = $region77
                $region74: #{tpu_custom_call.1} parent=62 // loop_body
                  %v320 = vld [vmem:[%s318] sm:$0xf]
                  %321 = vst [vmem:[%s319] sm:$0xf] %v320
                  %v322 = vld [vmem:[%s318 + $0xc] sm:$0xf]
                  %323 = vst [vmem:[%s319 + $0x4] sm:$0xf] %v322
                  %v324 = vld [vmem:[%s318 + $0x18] sm:$0xf]
                  %325 = vst [vmem:[%s319 + $0x8] sm:$0xf] %v324
                  %v326 = vld [vmem:[%s318 + $0x24] sm:$0xf]
                  %327 = vst [vmem:[%s319 + $0xc] sm:$0xf] %v326
                $region75: #{tpu_custom_call.1} parent=62 // loop_footer
                  %s317 = sadd.s32 1, %s313
                $region76: #{tpu_custom_call.1} parent=62 // loop_footer_branch
                  %312 = sbr.rel target = $region72
                $region77: #{tpu_custom_call.1} parent=62 // loop_exit
                  _
              $region63: #{tpu_custom_call.1} parent=47 // pred_fallthru
                _
            $region48: #{tpu_custom_call.1} parent=43 // pred_fallthru
              _
            // Predicated region
            $region49: #{tpu_custom_call.1} parent=43 // pred_check
              _
            $region50: #{tpu_custom_call.1} parent=43 // pred_check_branch
              %283 = sbr.rel (0) target = $region52
            $region51: #{tpu_custom_call.1} parent=43 // pred_region
              loop: start=0, step=1, limit=1
              $region53: #{tpu_custom_call.1} parent=51 // loop_pre_header
                _
              $region54: #{tpu_custom_call.1} parent=51 // loop_header
                %s286 = sphi 0, %s290
                %p287 = scmp.ge.s32.totalorder %s286, 1
                %s291 = sphi %s277, %s277
                %s292 = sphi %s275, %s275
              $region55: #{tpu_custom_call.1} parent=51 // loop_header_branch
                %289 = sbr.rel (%p287) target = $region59
              $region56: #{tpu_custom_call.1} parent=51 // loop_body
                %v293 = vld [vmem:[%s291] sm:$0xf]
                %294 = vst [vmem:[%s292] sm:$0xf] %v293
                %v295 = vld [vmem:[%s291 + $0xc] sm:$0xf]
                %296 = vst [vmem:[%s292 + $0x4] sm:$0xf] %v295
                %v297 = vld [vmem:[%s291 + $0x18] sm:$0xf]
                %298 = vst [vmem:[%s292 + $0x8] sm:$0xf] %v297
                %v299 = vld [vmem:[%s291 + $0x24] sm:$0xf]
                %300 = vst [vmem:[%s292 + $0xc] sm:$0xf] %v299
              $region57: #{tpu_custom_call.1} parent=51 // loop_footer
                %s290 = sadd.s32 1, %s286
              $region58: #{tpu_custom_call.1} parent=51 // loop_footer_branch
                %285 = sbr.rel target = $region54
              $region59: #{tpu_custom_call.1} parent=51 // loop_exit
                _
            $region52: #{tpu_custom_call.1} parent=43 // pred_fallthru
              _
          $region44: #{tpu_custom_call.1} parent=39 // pred_fallthru
            _
          %328 = vnop
        $region40: #{tpu_custom_call.1} parent=31 // pred_fallthru
          _
        // Predicated region
        $region78: #{tpu_custom_call.1} parent=31 // pred_check
          %p329 = pneg %p185
        $region79: #{tpu_custom_call.1} parent=31 // pred_check_branch
          %331 = sbr.rel (%p329) target = $region81
        $region80: #{tpu_custom_call.1} parent=31 // pred_region
          %p332 = scmp.lt.s32.totalorder %s25, 2
          %s333 = scalar_select %p332, %s25, 2
          %s334 = scalar_lea.vmem %s6, %s333
        $region81: #{tpu_custom_call.1} parent=31 // pred_fallthru
          _
      $region32: #{tpu_custom_call.1} parent=5 // pred_fallthru
        _
      %p335 = scmp.le.s32.totalorder 1, %s17
      %p336 = scmp.lt.s32.totalorder %s17, 10
      %p337 = pnand %p335, %p336
      %p338 = pneg %p337
      // Predicated region
      $region82: #{tpu_custom_call.1} parent=5 // pred_check
        _
      $region83: #{tpu_custom_call.1} parent=5 // pred_check_branch
        %340 = sbr.rel (%p337) target = $region85
      $region84: #{tpu_custom_call.1} parent=5 // pred_region
        %s341 = ssub.s32 %s17, 1
        // Predicated region
        $region86: #{tpu_custom_call.1} parent=84 // pred_check
          %p342 = pneg %p76
        $region87: #{tpu_custom_call.1} parent=84 // pred_check_branch
          %344 = sbr.rel (%p342) target = $region89
        $region88: #{tpu_custom_call.1} parent=84 // pred_region
          %345 = dma.done [#allocation4], 256
        $region89: #{tpu_custom_call.1} parent=84 // pred_fallthru
          _
        %s346 = sand.u32 %s152, 1
        %s347 = sand.u32 %s152, 1
        %s348 = smul.addr %s347, 16
        %s349 = scalar_lea.vmem [#allocation6], %s348
        // Predicated region
        $region90: #{tpu_custom_call.1} parent=84 // pred_check
          %p350 = pneg %p165
        $region91: #{tpu_custom_call.1} parent=84 // pred_check_branch
          %352 = sbr.rel (%p350) target = $region93
        $region92: #{tpu_custom_call.1} parent=84 // pred_region
          _
        $region93: #{tpu_custom_call.1} parent=84 // pred_fallthru
          _
        %s353 = smul.u32 2, %s26
        %p354 = scmp.lt.s32.totalorder %s353, 5
        %s355 = scalar_select %p354, %s353, 5
        %s356 = smul.addr %s355, 4
        %s357 = scalar_lea.vmem %s0, %s356
        %p358 = pneg %p55
        %p359 = pneg %p52
        %p360 = pneg %p76
        %p361 = pneg %p73
        %p362 = pneg %p97
        %p363 = pneg %p94
        %p364 = pneg %p118
        %p365 = pneg %p115
        %p366 = pneg %p139
        %p367 = pneg %p136
        %s368 = sand.u32 %s152, 1
        %s369 = sand.u32 %s152, 1
        %s370 = smul.addr %s369, 16
        %s371 = scalar_lea.vmem [#allocation6], %s370
        %p372 = pneg %p165
        %p373 = pneg %p162
        %p374 = scmp.lt.s32.totalorder %s27, 2
        %s375 = scalar_select %p374, %s27, 2
        %s376 = scalar_lea.vmem %s6, %s375
        %p377 = pneg %p191
        %p378 = pneg %p188
        %p379 = pneg %p219
        %p380 = pneg %p216
        %s381 = sand.u32 %s206, 1
        %s382 = scalar_lea.sflag [#allocation5], %s381
        %s383 = sand.u32 %s206, 1
        %s384 = smul.addr %s383, 16
        %s385 = scalar_lea.vmem [#allocation7], %s384
        %s386 = smul.u32 2, %s26
        %p387 = scmp.lt.s32.totalorder %s386, 5
        %s388 = scalar_select %p387, %s386, 5
        %s389 = smul.addr %s388, 4
        %s390 = scalar_lea.vmem %s0, %s389
        %s391 = smul.u32 2, %s26
        %p392 = scmp.lt.s32.totalorder %s27, 2
        %s393 = scalar_select %p392, %s27, 2
        %s394 = scalar_lea.vmem %s6, %s393
        %s395 = smul.u32 2, %s26
        %p397 = scmp.eq.s32.totalorder %s27, 0
        // Predicated region
        $region94: #{tpu_custom_call.1} parent=84 // pred_check
          %p398 = pneg %p397
        $region95: #{tpu_custom_call.1} parent=84 // pred_check_branch
          %400 = sbr.rel (%p398) target = $region97
        $region96: #{tpu_custom_call.1} parent=84 // pred_region
          %v401 = vld [vmem:[%s390] sm:$0xf]
          %v402 = vld [vmem:[%s390 + $0x4] sm:$0xf]
          %v403 = vld [vmem:[#allocation3] sm:$0xf]
          %v404 = vld [vmem:[#allocation3 + $0x4] sm:$0xf]
          %v405 = vld [vmem:[#allocation3 + $0x8] sm:$0xf]
          %v406 = vld [vmem:[#allocation3 + $0xc] sm:$0xf]
          %v407 = vld [vmem:[%s2] sm:$0x1]
          %v409 = vlaneseq
          %v410 = vshrl.u32 %v409, 7
          %v411 = vsub.s32 0, %v410
          %v412 = vrot.slane %v407, %v411
          %v416 = vunpack.c.l.b16 %v401
          %v417 = vunpack.c.l.b16 %v402
          %v418 = vpack.c.b16 %v417, %v416
          %v423 = vunpack.c.l.b16 %v403
          %v424 = vunpack.c.l.b16 %v404
          %v425 = vunpack.c.l.b16 %v405
          %v426 = vunpack.c.l.b16 %v406
          %v427 = vpack.c.b16 %v424, %v423
          %v428 = vpack.c.b16 %v426, %v425
          %vm431 = vcmask 261120
          %v433 = vsel %vm431, %v418, 0
          %435 = vmatprep.subr.bf16.mxu0 0
          %436 = vmatpush1.bf16.msra.mxu0 %v427
          %437 = vmatprep.subr.bf16.mxu0 0
          %438 = vmatpush1.bf16.msra.mxu0 %v428
          %439 = vmatprep.subr.bf16.mxu0 0
          %440 = vmatpush1.bf16.msra.mxu0 0
          %441 = vmatprep.subr.bf16.mxu0 0
          %442 = vmatpush1.bf16.msra.mxu0 0
          %443 = vmatprep.subr.bf16.mxu0 0
          %444 = vmatpush1.bf16.msra.mxu0 0
          %445 = vmatprep.subr.bf16.mxu0 0
          %446 = vmatpush1.bf16.msra.mxu0 0
          %447 = vmatprep.subr.bf16.mxu0 0
          %448 = vmatpush1.bf16.msra.mxu0 0
          %449 = vmatprep.subr.bf16.mxu0 0
          %450 = vmatpush1.bf16.msra.mxu0 0
          %451 = vmatprep.subr.bf16.mxu0 0
          %452 = vmatpush1.bf16.msra.mxu0 0
          %453 = vmatprep.subr.bf16.mxu0 0
          %454 = vmatpush1.bf16.msra.mxu0 0
          %455 = vmatprep.subr.bf16.mxu0 0
          %456 = vmatpush1.bf16.msra.mxu0 0
          %457 = vmatprep.subr.bf16.mxu0 0
          %458 = vmatpush1.bf16.msra.mxu0 0
          %459 = vmatprep.subr.bf16.mxu0 0
          %460 = vmatpush1.bf16.msra.mxu0 0
          %461 = vmatprep.subr.bf16.mxu0 0
          %462 = vmatpush1.bf16.msra.mxu0 0
          %463 = vmatprep.subr.bf16.mxu0 0
          %464 = vmatpush1.bf16.msra.mxu0 0
          %465 = vmatprep.subr.bf16.mxu0 0
          %466 = vmatpush1.bf16.msra.mxu0 0
          %467 = vmatprep.mubr.bf16.mxu0 0
          %468 = vmatmul.mubr.bf16.gmra.mrb[0].mxu0 %v433
          %v469 = vpop.f32.mrb[0].mxu0
          %v470 = vadd.f32 %v412, %v469
          %v471 = vpop.f32.mrb[0].mxu0
          %v472 = vpop.f32.mrb[0].mxu0
          %v473 = vadd.f32 %v412, %v472
          %v474 = vpop.f32.mrb[0].mxu0
          %475 = vdwg.mxu0
          %v476 = vmul.f32 %v470, 0.5
          %v477 = vmul.f32 %v473, 0.5
          %v478 = vmul.f32 %v470, 0.70710677
          %v479 = vmul.f32 %v473, 0.70710677
          %v480 = verf.f32.pop %v478
          %v481 = verf.f32.pop %v479
          %v482 = vadd.f32 %v480, 1.0
          %v483 = vadd.f32 %v481, 1.0
          %v484 = vmul.f32 %v476, %v482
          %v485 = vmul.f32 %v477, %v483
          %v486 = vsel %vm431, %v484, 0.0
          %487 = vadd.xlane.f32.xlu0 %v486
          %v488 = vpop.xlane.xlu0 %487
          %v489 = vsel %vm431, %v485, 0.0
          %490 = vadd.xlane.f32.xlu0 %v489
          %v491 = vpop.xlane.xlu0 %490
          %v492 = vrcp.pop 32.0
          %v493 = vmul.f32 %v488, %v492
          %v494 = vmul.f32 %v491, %v492
          %v495 = vsub.f32 %v484, %v493
          %v496 = vsub.f32 %v485, %v494
          %v497 = vmul.f32 %v495, %v495
          %v498 = vmul.f32 %v496, %v496
          %v499 = vsel %vm431, %v497, 0.0
          %500 = vadd.xlane.f32.xlu0 %v499
          %v501 = vpop.xlane.xlu0 %500
          %v502 = vsel %vm431, %v498, 0.0
          %503 = vadd.xlane.f32.xlu0 %v502
          %v504 = vpop.xlane.xlu0 %503
          %v505 = vmul.f32 %v501, %v492
          %v506 = vmul.f32 %v504, %v492
          %v507 = vadd.f32 %v505, 1e-12
          %v508 = vadd.f32 %v506, 1e-12
          %v509 = vrsqrt.pop %v507
          %v510 = vrsqrt.pop %v508
          %v511 = vmul.f32 %v495, %v509
          %v512 = vmul.f32 %v496, %v510
          %v513 = vld [vmem:[%s3] sm:$0x1]
          %v515 = vlaneseq
          %v516 = vshrl.u32 %v515, 7
          %v517 = vsub.s32 0, %v516
          %v518 = vrot.slane %v513, %v517
          %v520 = vmul.f32 %v511, %v518
          %v521 = vmul.f32 %v512, %v518
          %v522 = vld [vmem:[%s4] sm:$0x1]
          %v524 = vlaneseq
          %v525 = vshrl.u32 %v524, 7
          %v526 = vsub.s32 0, %v525
          %v527 = vrot.slane %v522, %v526
          %v529 = vadd.f32 %v520, %v527
          %v530 = vadd.f32 %v521, %v527
          %v531 = vpack.c.bf16 %v530, %v529
          %532 = vst.msk [vmem:[#allocation2] sm:$0xff] %vm431, %v531
        $region97: #{tpu_custom_call.1} parent=84 // pred_fallthru
          _
        %v533 = vld [vmem:[#allocation2] sm:$0xff]
        %v534 = vld [vmem:[%s349] sm:$0xf]
        %v535 = vld [vmem:[%s349 + $0x4] sm:$0xf]
        %v536 = vld [vmem:[%s349 + $0x8] sm:$0xf]
        %v537 = vld [vmem:[%s349 + $0xc] sm:$0xf]
        %v538 = vld [vmem:[%s394] sm:$0x1]
        %v540 = vlaneseq
        %v541 = vshrl.u32 %v540, 7
        %v542 = vsub.s32 0, %v541
        %v543 = vrot.slane %v538, %v542
        %v549 = vunpack.c.l.b16 %v534
        %v550 = vunpack.c.l.b16 %v535
        %v551 = vunpack.c.l.b16 %v536
        %v552 = vunpack.c.l.b16 %v537
        %v553 = vpack.c.b16 %v550, %v549
        %v554 = vpack.c.b16 %v552, %v551
        %vm557 = vcmask 261120
        %v559 = vsel %vm557, %v533, 0
        %561 = vmatprep.subr.bf16.mxu0 0
        %562 = vmatpush1.bf16.msra.mxu0 %v553
        %563 = vmatprep.subr.bf16.mxu0 0
        %564 = vmatpush1.bf16.msra.mxu0 %v554
        %565 = vmatprep.subr.bf16.mxu0 0
        %566 = vmatpush1.bf16.msra.mxu0 0
        %567 = vmatprep.subr.bf16.mxu0 0
        %568 = vmatpush1.bf16.msra.mxu0 0
        %569 = vmatprep.subr.bf16.mxu0 0
        %570 = vmatpush1.bf16.msra.mxu0 0
        %571 = vmatprep.subr.bf16.mxu0 0
        %572 = vmatpush1.bf16.msra.mxu0 0
        %573 = vmatprep.subr.bf16.mxu0 0
        %574 = vmatpush1.bf16.msra.mxu0 0
        %575 = vmatprep.subr.bf16.mxu0 0
        %576 = vmatpush1.bf16.msra.mxu0 0
        %577 = vmatprep.subr.bf16.mxu0 0
        %578 = vmatpush1.bf16.msra.mxu0 0
        %579 = vmatprep.subr.bf16.mxu0 0
        %580 = vmatpush1.bf16.msra.mxu0 0
        %581 = vmatprep.subr.bf16.mxu0 0
        %582 = vmatpush1.bf16.msra.mxu0 0
        %583 = vmatprep.subr.bf16.mxu0 0
        %584 = vmatpush1.bf16.msra.mxu0 0
        %585 = vmatprep.subr.bf16.mxu0 0
        %586 = vmatpush1.bf16.msra.mxu0 0
        %587 = vmatprep.subr.bf16.mxu0 0
        %588 = vmatpush1.bf16.msra.mxu0 0
        %589 = vmatprep.subr.bf16.mxu0 0
        %590 = vmatpush1.bf16.msra.mxu0 0
        %591 = vmatprep.subr.bf16.mxu0 0
        %592 = vmatpush1.bf16.msra.mxu0 0
        %593 = vmatprep.mubr.bf16.mxu0 0
        %594 = vmatmul.mubr.bf16.gmra.mrb[0].mxu0 %v559
        %v595 = vpop.f32.mrb[0].mxu0
        %v596 = vadd.f32 %v543, %v595
        %v597 = vpop.f32.mrb[0].mxu0
        %v598 = vpop.f32.mrb[0].mxu0
        %v599 = vadd.f32 %v543, %v598
        %v600 = vpop.f32.mrb[0].mxu0
        %601 = vdwg.mxu0
        %602 = vst [vmem:[%s385] sm:$0xff] %v596
        %603 = vst [vmem:[%s385 + $0x8] sm:$0xff] %v599
        %s604 = sand.u32 %s206, 1
        %s605 = scalar_lea.sflag [#allocation5], %s604
        %s606 = sand.u32 %s206, 1
        %s607 = smul.addr %s606, 16
        %s608 = scalar_lea.vmem [#allocation7], %s607
        // Predicated region
        $region98: #{tpu_custom_call.1} parent=84 // pred_check
          %p609 = pneg %p216
        $region99: #{tpu_custom_call.1} parent=84 // pred_check_branch
          %611 = sbr.rel (%p609) target = $region101
        $region100: #{tpu_custom_call.1} parent=84 // pred_region
          %s612 = smul.u32 2, %s26
          %s614 = ssub.s32 256, 256
          %615 = vsyncadd %s605, %s614
          %s616 = smul.addr %s612, 3
          %s617 = sadd.s32 %s27, %s616
          %s618 = smul.addr %s617, 128
          %s619 = scalar_lea.hbm %s7, %s618
          %s620 = sshll.u32 %s608, 4
          %s621 = int_to_ptr.vmem [resolvable:$true] %s620
          %626 = dma.vmem_to_hbm [thread:$0]  %s621, 256, %s619, %s605, 128, 384, 8
        $region101: #{tpu_custom_call.1} parent=84 // pred_fallthru
          _
      $region85: #{tpu_custom_call.1} parent=5 // pred_fallthru
        _
      %p627 = scmp.le.s32.totalorder 2, %s17
      // Predicated region
      $region102: #{tpu_custom_call.1} parent=5 // pred_check
        %p628 = pneg %p627
      $region103: #{tpu_custom_call.1} parent=5 // pred_check_branch
        %630 = sbr.rel (%p628) target = $region105
      $region104: #{tpu_custom_call.1} parent=5 // pred_region
        %s631 = ssub.s32 %s17, 2
        // Predicated region
        $region106: #{tpu_custom_call.1} parent=104 // pred_check
          %p632 = pneg %p222
        $region107: #{tpu_custom_call.1} parent=104 // pred_check_branch
          %634 = sbr.rel (%p632) target = $region109
        $region108: #{tpu_custom_call.1} parent=104 // pred_region
          %s635 = sand.u32 %s207, 1
          %s636 = scalar_lea.sflag [#allocation5], %s635
          %s637 = sand.u32 %s207, 1
          %s638 = smul.addr %s637, 16
          %s639 = scalar_lea.vmem [#allocation7], %s638
          %640 = dma.done %s636, 256
        $region109: #{tpu_custom_call.1} parent=104 // pred_fallthru
          _
      $region105: #{tpu_custom_call.1} parent=5 // pred_fallthru
        _
    $region6: #{tpu_custom_call.1} parent=1 // loop_footer
      %s21 = sadd.s32 1, %s17
    $region7: #{tpu_custom_call.1} parent=1 // loop_footer_branch
      %16 = sbr.rel target = $region3
    $region8: #{tpu_custom_call.1} parent=1 // loop_exit
      _
    %641 = vsyncpa [#allocation4], 1
    %s642 = scalar_lea.sflag [#allocation4], 1
    %643 = vsyncpa %s642, 1
    %644 = vsyncpa [#allocation5], 1
    %s645 = scalar_lea.sflag [#allocation5], 1
    %646 = vsyncpa %s645, 1

// kernel: tpu_custom_call.1
$region0: #{tpu_custom_call.1}
  #allocation0 [shape = 'u32[]', space=smem, size = 0x4, offset = 0x4, fixed_abs, tag = 'smem constant byte address 0x4 - core index']
  #allocation1 [shape = 'u32[144,128]{1,0:T(1,128)}', space=vmem, size = 0x12000, scoped, tag = 'internal scratch']
  #allocation2 [shape = 'bf16[16,32]{1,0:T(16,128)(2,1)}', space=vmem, size = 0x1000, scoped, tag = 'scratch operand']
  %s0 = inlined_call_operand.vmem [shape: bf16[48,32], index: 0, kind: input, shape index: {}]
  %s1 = inlined_call_operand.hbm [shape: bf16[32,32], index: 1, kind: input, shape index: {}]
  %s2 = inlined_call_operand.vmem [shape: f32[1,32], index: 2, kind: input, shape index: {}]
  %s3 = inlined_call_operand.vmem [shape: f32[1,32], index: 3, kind: input, shape index: {}]
  %s4 = inlined_call_operand.vmem [shape: f32[1,32], index: 4, kind: input, shape index: {}]
  %s5 = inlined_call_operand.vmem [shape: bf16[32,384], index: 5, kind: input, shape index: {}]
  %s6 = inlined_call_operand.vmem [shape: f32[1,384], index: 6, kind: input, shape index: {}]
  %s7 = inlined_call_operand.hbm [shape: f32[48,384], index: 7, kind: output, shape index: {}]
  %s8 = sld [smem:[#allocation0]]
  $region110: #{tpu_custom_call.1} parent=0
    _
  %s10 = ssub.s32 1, %s8
  %s11 = scalar_select 0, %s10, %s8
  $region1: #{tpu_custom_call.1} parent=0
    #allocation3 [shape = 'u8[8192]{0}', space=vmem, size = 0x2000, scoped, tag = 'input window, operand 1, single buffered']
    #allocation4 [shape = 's32[2]{0}', space=sflag, size = 0x8, scoped, tag = 'scoped memory for tpu_custom_call.1']
    #allocation5 [shape = 's32[2]{0}', space=sflag, size = 0x8, scoped, tag = 'scoped memory for tpu_custom_call.1']
    #allocation6 [shape = 'u8[16384]{0}', space=vmem, size = 0x4000, scoped, tag = 'input window, operand 5']
    #allocation7 [shape = 'u8[16384]{0}', space=vmem, size = 0x4000, scoped, tag = 'output window, operand 0']
    %12 = vsyncpa [#allocation4], 0
    %13 = vsyncpa [#allocation5], 0
    %s14 = scalar_lea.sflag [#allocation5], 1
    %15 = vsyncpa %s14, 0
    loop: start=0, step=1, limit=11
    $region2: #{tpu_custom_call.1} parent=1 // loop_pre_header
      _
    $region3: #{tpu_custom_call.1} parent=1 // loop_header
      %s17 = sphi 0, %s21
      %p18 = scmp.ge.s32.totalorder %s17, 11
      %s24 = sphi 0, %s36
      %s25 = sphi 0, %s32
      %s26 = sphi 0, %s24
      %s27 = sphi 0, %s25
      %s28 = sphi 0, %s26
      %s29 = sphi 0, %s27
      %s39 = sphi 0, %s41
      %s42 = sphi 0, %s39
      %s43 = sphi 0, %s42
      %s59 = sphi 0, %s43
      %s63 = sphi 0, %s63
      %s65 = sphi 0, %s63
      %s66 = sphi 0, %s65
      %s80 = sphi 0, %s66
      %s84 = sphi 0, %s84
      %s86 = sphi 0, %s84
      %s87 = sphi 0, %s86
      %s101 = sphi 0, %s87
      %s105 = sphi 0, %s105
      %s107 = sphi 0, %s105
      %s108 = sphi 0, %s107
      %s122 = sphi 0, %s108
      %s126 = sphi 0, %s126
      %s128 = sphi 0, %s126
      %s129 = sphi 0, %s128
      %s143 = sphi 0, %s129
      %s149 = sphi 0, %s151
      %s152 = sphi 0, %s149
      %s153 = sphi 0, %s152
      %s169 = sphi 0, %s153
      %s175 = sphi 0, %s177
      %s178 = sphi 0, %s175
      %s179 = sphi 0, %s178
      %s195 = sphi 0, %s179
      %s203 = sphi 0, %s205
      %s206 = sphi 0, %s203
      %s207 = sphi 0, %s206
      %s223 = sphi 0, %s207
    $region4: #{tpu_custom_call.1} parent=1 // loop_header_branch
      %20 = sbr.rel (%p18) target = $region8
    $region5: #{tpu_custom_call.1} parent=1 // loop_body
      %s22 = ssub.s32 %s17, 1
      %s23 = ssub.s32 %s17, 2
      %s30 = sadd.s32 1, %s25
      %p31 = scmp.ge.s32.totalorder %s30, 3
      %s32 = scalar_select %p31, 0, %s30
      %s33 = sadd.s32 1, %s24
      %s34 = scalar_select %p31, %s33, %s24
      %p35 = scmp.ge.s32.totalorder %s34, 3
      %s36 = scalar_select %p35, 0, %s34
      %s37 = ssub.s32 %s24, %s36
      %p38 = scmp.eq.s32.totalorder %s37, 0
      %s40 = sadd.s32 %s39, 1
      %s41 = scalar_select %p38, %s39, %s40
      %p44 = pneg %p38
      %p45 = scmp.eq.s32.totalorder %s17, 8
      %p46 = por %p44, %p45
      %p47 = scmp.ne.s32.totalorder %s39, %s42
      %p48 = scmp.eq.s32.totalorder %s17, 0
      %p49 = por %p47, %p48
      %p50 = scmp.ne.s32.totalorder %s39, %s42
      %p51 = scmp.eq.s32.totalorder %s22, 8
      %p52 = por %p50, %p51
      %p53 = scmp.ne.s32.totalorder %s42, %s43
      %p54 = scmp.eq.s32.totalorder %s22, 0
      %p55 = por %p53, %p54
      %p56 = scmp.ne.s32.totalorder %s42, %s43
      %p57 = scmp.eq.s32.totalorder %s23, 8
      %p58 = por %p56, %p57
      %p60 = scmp.ne.s32.totalorder %s43, %s59
      %p61 = scmp.eq.s32.totalorder %s23, 0
      %p62 = por %p60, %p61
      %s64 = sadd.s32 %s63, 1
      %p67 = scmp.eq.s32.totalorder %s17, 8
      %p68 = scmp.ne.s32.totalorder %s63, %s65
      %p69 = scmp.eq.s32.totalorder %s17, 0
      %p70 = por %p68, %p69
      %p71 = scmp.ne.s32.totalorder %s63, %s65
      %p72 = scmp.eq.s32.totalorder %s22, 8
      %p73 = por %p71, %p72
      %p74 = scmp.ne.s32.totalorder %s65, %s66
      %p75 = scmp.eq.s32.totalorder %s22, 0
      %p76 = por %p74, %p75
      %p77 = scmp.ne.s32.totalorder %s65, %s66
      %p78 = scmp.eq.s32.totalorder %s23, 8
      %p79 = por %p77, %p78
      %p81 = scmp.ne.s32.totalorder %s66, %s80
      %p82 = scmp.eq.s32.totalorder %s23, 0
      %p83 = por %p81, %p82
      %s85 = sadd.s32 %s84, 1
      %p88 = scmp.eq.s32.totalorder %s17, 8
      %p89 = scmp.ne.s32.totalorder %s84, %s86
      %p90 = scmp.eq.s32.totalorder %s17, 0
      %p91 = por %p89, %p90
      %p92 = scmp.ne.s32.totalorder %s84, %s86
      %p93 = scmp.eq.s32.totalorder %s22, 8
      %p94 = por %p92, %p93
      %p95 = scmp.ne.s32.totalorder %s86, %s87
      %p96 = scmp.eq.s32.totalorder %s22, 0
      %p97 = por %p95, %p96
      %p98 = scmp.ne.s32.totalorder %s86, %s87
      %p99 = scmp.eq.s32.totalorder %s23, 8
      %p100 = por %p98, %p99
      %p102 = scmp.ne.s32.totalorder %s87, %s101
      %p103 = scmp.eq.s32.totalorder %s23, 0
      %p104 = por %p102, %p103
      %s106 = sadd.s32 %s105, 1
      %p109 = scmp.eq.s32.totalorder %s17, 8
      %p110 = scmp.ne.s32.totalorder %s105, %s107
      %p111 = scmp.eq.s32.totalorder %s17, 0
      %p112 = por %p110, %p111
      %p113 = scmp.ne.s32.totalorder %s105, %s107
      %p114 = scmp.eq.s32.totalorder %s22, 8
      %p115 = por %p113, %p114
      %p116 = scmp.ne.s32.totalorder %s107, %s108
      %p117 = scmp.eq.s32.totalorder %s22, 0
      %p118 = por %p116, %p117
      %p119 = scmp.ne.s32.totalorder %s107, %s108
      %p120 = scmp.eq.s32.totalorder %s23, 8
      %p121 = por %p119, %p120
      %p123 = scmp.ne.s32.totalorder %s108, %s122
      %p124 = scmp.eq.s32.totalorder %s23, 0
      %p125 = por %p123, %p124
      %s127 = sadd.s32 %s126, 1
      %p130 = scmp.eq.s32.totalorder %s17, 8
      %p131 = scmp.ne.s32.totalorder %s126, %s128
      %p132 = scmp.eq.s32.totalorder %s17, 0
      %p133 = por %p131, %p132
      %p134 = scmp.ne.s32.totalorder %s126, %s128
      %p135 = scmp.eq.s32.totalorder %s22, 8
      %p136 = por %p134, %p135
      %p137 = scmp.ne.s32.totalorder %s128, %s129
      %p138 = scmp.eq.s32.totalorder %s22, 0
      %p139 = por %p137, %p138
      %p140 = scmp.ne.s32.totalorder %s128, %s129
      %p141 = scmp.eq.s32.totalorder %s23, 8
      %p142 = por %p140, %p141
      %p144 = scmp.ne.s32.totalorder %s129, %s143
      %p145 = scmp.eq.s32.totalorder %s23, 0
      %p146 = por %p144, %p145
      %s147 = ssub.s32 %s25, %s32
      %p148 = scmp.eq.s32.totalorder %s147, 0
      %s150 = sadd.s32 %s149, 1
      %s151 = scalar_select %p148, %s149, %s150
      %p154 = pneg %p148
      %p155 = scmp.eq.s32.totalorder %s17, 8
      %p156 = por %p154, %p155
      %p157 = scmp.ne.s32.totalorder %s149, %s152
      %p158 = scmp.eq.s32.totalorder %s17, 0
      %p159 = por %p157, %p158
      %p160 = scmp.ne.s32.totalorder %s149, %s152
      %p161 = scmp.eq.s32.totalorder %s22, 8
      %p162 = por %p160, %p161
      %p163 = scmp.ne.s32.totalorder %s152, %s153
      %p164 = scmp.eq.s32.totalorder %s22, 0
      %p165 = por %p163, %p164
      %p166 = scmp.ne.s32.totalorder %s152, %s153
      %p167 = scmp.eq.s32.totalorder %s23, 8
      %p168 = por %p166, %p167
      %p170 = scmp.ne.s32.totalorder %s153, %s169
      %p171 = scmp.eq.s32.totalorder %s23, 0
      %p172 = por %p170, %p171
      %s173 = ssub.s32 %s25, %s32
      %p174 = scmp.eq.s32.totalorder %s173, 0
      %s176 = sadd.s32 %s175, 1
      %s177 = scalar_select %p174, %s175, %s176
      %p180 = pneg %p174
      %p181 = scmp.eq.s32.totalorder %s17, 8
      %p182 = por %p180, %p181
      %p183 = scmp.ne.s32.totalorder %s175, %s178
      %p184 = scmp.eq.s32.totalorder %s17, 0
      %p185 = por %p183, %p184
      %p186 = scmp.ne.s32.totalorder %s175, %s178
      %p187 = scmp.eq.s32.totalorder %s22, 8
      %p188 = por %p186, %p187
      %p189 = scmp.ne.s32.totalorder %s178, %s179
      %p190 = scmp.eq.s32.totalorder %s22, 0
      %p191 = por %p189, %p190
      %p192 = scmp.ne.s32.totalorder %s178, %s179
      %p193 = scmp.eq.s32.totalorder %s23, 8
      %p194 = por %p192, %p193
      %p196 = scmp.ne.s32.totalorder %s179, %s195
      %p197 = scmp.eq.s32.totalorder %s23, 0
      %p198 = por %p196, %p197
      %s199 = ssub.s32 %s24, %s36
      %s200 = ssub.s32 %s25, %s32
      %s201 = sor.u32 %s199, %s200
      %p202 = scmp.eq.s32.totalorder %s201, 0
      %s204 = sadd.s32 %s203, 1
      %s205 = scalar_select %p202, %s203, %s204
      %p208 = pneg %p202
      %p209 = scmp.eq.s32.totalorder %s17, 8
      %p210 = por %p208, %p209
      %p211 = scmp.ne.s32.totalorder %s203, %s206
      %p212 = scmp.eq.s32.totalorder %s17, 0
      %p213 = por %p211, %p212
      %p214 = scmp.ne.s32.totalorder %s203, %s206
      %p215 = scmp.eq.s32.totalorder %s22, 8
      %p216 = por %p214, %p215
      %p217 = scmp.ne.s32.totalorder %s206, %s207
      %p218 = scmp.eq.s32.totalorder %s22, 0
      %p219 = por %p217, %p218
      %p220 = scmp.ne.s32.totalorder %s206, %s207
      %p221 = scmp.eq.s32.totalorder %s23, 8
      %p222 = por %p220, %p221
      %p224 = scmp.ne.s32.totalorder %s207, %s223
      %p225 = scmp.eq.s32.totalorder %s23, 0
      %p226 = por %p224, %p225
      %p227 = scmp.le.s32.totalorder 1, %s17
      %p228 = scmp.lt.s32.totalorder %s17, 10
      %p229 = pnand %p227, %p228
      %p230 = pneg %p229
      // Predicated region
      $region9: #{tpu_custom_call.1} parent=5 // pred_check
        _
      $region10: #{tpu_custom_call.1} parent=5 // pred_check_branch
        %232 = sbr.rel (%p229) target = $region12
      $region11: #{tpu_custom_call.1} parent=5 // pred_region
        %s233 = ssub.s32 %s17, 1
        // Predicated region
        $region13: #{tpu_custom_call.1} parent=11 // pred_check
          %p234 = pneg %p76
        $region14: #{tpu_custom_call.1} parent=11 // pred_check_branch
          %236 = sbr.rel (%p234) target = $region16
        $region15: #{tpu_custom_call.1} parent=11 // pred_region
          %s238 = ssub.s32 256, 256
          %239 = vsyncadd [#allocation4], %s238
          %s240 = sshll.u32 [#allocation3], 4
          %s241 = int_to_ptr.vmem [resolvable:$true] %s240
          %246 = dma.hbm_to_vmem [thread:$0]  %s1, 256, %s241, [#allocation4], 64, 64, 4
        $region16: #{tpu_custom_call.1} parent=11 // pred_fallthru
          _
        // Predicated region
        $region17: #{tpu_custom_call.1} parent=11 // pred_check
          %p247 = pneg %p97
        $region18: #{tpu_custom_call.1} parent=11 // pred_check_branch
          %249 = sbr.rel (%p247) target = $region20
        $region19: #{tpu_custom_call.1} parent=11 // pred_region
          _
        $region20: #{tpu_custom_call.1} parent=11 // pred_fallthru
          _
        // Predicated region
        $region21: #{tpu_custom_call.1} parent=11 // pred_check
          %p250 = pneg %p118
        $region22: #{tpu_custom_call.1} parent=11 // pred_check_branch
          %252 = sbr.rel (%p250) target = $region24
        $region23: #{tpu_custom_call.1} parent=11 // pred_region
          _
        $region24: #{tpu_custom_call.1} parent=11 // pred_fallthru
          _
        // Predicated region
        $region25: #{tpu_custom_call.1} parent=11 // pred_check
          %p253 = pneg %p139
        $region26: #{tpu_custom_call.1} parent=11 // pred_check_branch
          %255 = sbr.rel (%p253) target = $region28
        $region27: #{tpu_custom_call.1} parent=11 // pred_region
          _
        $region28: #{tpu_custom_call.1} parent=11 // pred_fallthru
          _
      $region12: #{tpu_custom_call.1} parent=5 // pred_fallthru
        _
      %p256 = scmp.lt.s32.totalorder %s17, 9
      // Predicated region
      $region29: #{tpu_custom_call.1} parent=5 // pred_check
        %p257 = pneg %p256
      $region30: #{tpu_custom_call.1} parent=5 // pred_check_branch
        %259 = sbr.rel (%p257) target = $region32
      $region31: #{tpu_custom_call.1} parent=5 // pred_region
        // Predicated region
        $region33: #{tpu_custom_call.1} parent=31 // pred_check
          %p260 = pneg %p49
        $region34: #{tpu_custom_call.1} parent=31 // pred_check_branch
          %262 = sbr.rel (%p260) target = $region36
        $region35: #{tpu_custom_call.1} parent=31 // pred_region
          %s263 = smul.u32 2, %s24
          %p264 = scmp.lt.s32.totalorder %s263, 5
          %s265 = scalar_select %p264, %s263, 5
          %s266 = smul.addr %s265, 4
          %s267 = scalar_lea.vmem %s0, %s266
          %s268 = smul.u32 2, %s24
        $region36: #{tpu_custom_call.1} parent=31 // pred_fallthru
          _
        // Predicated region
        $region37: #{tpu_custom_call.1} parent=31 // pred_check
          %p269 = pneg %p159
        $region38: #{tpu_custom_call.1} parent=31 // pred_check_branch
          %271 = sbr.rel (%p269) target = $region40
        $region39: #{tpu_custom_call.1} parent=31 // pred_region
          %s272 = sand.u32 %s149, 1
          %s273 = sand.u32 %s149, 1
          %s274 = smul.addr %s273, 16
          %s275 = scalar_lea.vmem [#allocation6], %s274
          %s276 = smul.addr %s25, 4
          %s277 = scalar_lea.vmem %s5, %s276
          // Predicated region
          $region41: #{tpu_custom_call.1} parent=39 // pred_check
            _
          $region42: #{tpu_custom_call.1} parent=39 // pred_check_branch
            %279 = sbr.rel (0) target = $region44
          $region43: #{tpu_custom_call.1} parent=39 // pred_region
            // Predicated region
            $region45: #{tpu_custom_call.1} parent=43 // pred_check
              _
            $region46: #{tpu_custom_call.1} parent=43 // pred_check_branch
              %281 = sbr.rel target = $region48
            $region47: #{tpu_custom_call.1} parent=43 // pred_region
              // Predicated region
              $region60: #{tpu_custom_call.1} parent=47 // pred_check
                _
              $region61: #{tpu_custom_call.1} parent=47 // pred_check_branch
                %302 = sbr.rel (0) target = $region63
              $region62: #{tpu_custom_call.1} parent=47 // pred_region
                loop: start=0, step=1, limit=1
                $region64: #{tpu_custom_call.1} parent=62 // loop_pre_header
                  _
                $region65: #{tpu_custom_call.1} parent=62 // loop_header
                  %s304 = sphi 0, %s308
                  %p305 = scmp.ge.s32.totalorder %s304, 1
                  %s309 = sphi %s277, %s277
                  %s310 = sphi %s275, %s275
                $region66: #{tpu_custom_call.1} parent=62 // loop_header_branch
                  %307 = sbr.rel (%p305) target = $region70
                $region67: #{tpu_custom_call.1} parent=62 // loop_body
                  _
                $region68: #{tpu_custom_call.1} parent=62 // loop_footer
                  %s308 = sadd.s32 1, %s304
                $region69: #{tpu_custom_call.1} parent=62 // loop_footer_branch
                  %303 = sbr.rel target = $region65
                $region70: #{tpu_custom_call.1} parent=62 // loop_exit
                  _
                loop: start=0, step=1, limit=1
                $region71: #{tpu_custom_call.1} parent=62 // loop_pre_header
                  _
                $region72: #{tpu_custom_call.1} parent=62 // loop_header
                  %s313 = sphi 0, %s317
                  %p314 = scmp.ge.s32.totalorder %s313, 1
                  %s318 = sphi %s277, %s277
                  %s319 = sphi %s275, %s275
                $region73: #{tpu_custom_call.1} parent=62 // loop_header_branch
                  %316 = sbr.rel (%p314) target = $region77
                $region74: #{tpu_custom_call.1} parent=62 // loop_body
                  %v320 = vld [vmem:[%s318] sm:$0xf]
                  %321 = vst [vmem:[%s319] sm:$0xf] %v320
                  %v322 = vld [vmem:[%s318 + $0xc] sm:$0xf]
                  %323 = vst [vmem:[%s319 + $0x4] sm:$0xf] %v322
                  %v324 = vld [vmem:[%s318 + $0x18] sm:$0xf]
                  %325 = vst [vmem:[%s319 + $0x8] sm:$0xf] %v324
                  %v326 = vld [vmem:[%s318 + $0x24] sm:$0xf]
                  %327 = vst [vmem:[%s319 + $0xc] sm:$0xf] %v326
                $region75: #{tpu_custom_call.1} parent=62 // loop_footer
                  %s317 = sadd.s32 1, %s313
                $region76: #{tpu_custom_call.1} parent=62 // loop_footer_branch
                  %312 = sbr.rel target = $region72
                $region77: #{tpu_custom_call.1} parent=62 // loop_exit
                  _
              $region63: #{tpu_custom_call.1} parent=47 // pred_fallthru
                _
            $region48: #{tpu_custom_call.1} parent=43 // pred_fallthru
              _
            // Predicated region
            $region49: #{tpu_custom_call.1} parent=43 // pred_check
              _
            $region50: #{tpu_custom_call.1} parent=43 // pred_check_branch
              %283 = sbr.rel (0) target = $region52
            $region51: #{tpu_custom_call.1} parent=43 // pred_region
              loop: start=0, step=1, limit=1
              $region53: #{tpu_custom_call.1} parent=51 // loop_pre_header
                _
              $region54: #{tpu_custom_call.1} parent=51 // loop_header
                %s286 = sphi 0, %s290
                %p287 = scmp.ge.s32.totalorder %s286, 1
                %s291 = sphi %s277, %s277
                %s292 = sphi %s275, %s275
              $region55: #{tpu_custom_call.1} parent=51 // loop_header_branch
                %289 = sbr.rel (%p287) target = $region59
              $region56: #{tpu_custom_call.1} parent=51 // loop_body
                %v293 = vld [vmem:[%s291] sm:$0xf]
                %294 = vst [vmem:[%s292] sm:$0xf] %v293
                %v295 = vld [vmem:[%s291 + $0xc] sm:$0xf]
                %296 = vst [vmem:[%s292 + $0x4] sm:$0xf] %v295
                %v297 = vld [vmem:[%s291 + $0x18] sm:$0xf]
                %298 = vst [vmem:[%s292 + $0x8] sm:$0xf] %v297
                %v299 = vld [vmem:[%s291 + $0x24] sm:$0xf]
                %300 = vst [vmem:[%s292 + $0xc] sm:$0xf] %v299
              $region57: #{tpu_custom_call.1} parent=51 // loop_footer
                %s290 = sadd.s32 1, %s286
              $region58: #{tpu_custom_call.1} parent=51 // loop_footer_branch
                %285 = sbr.rel target = $region54
              $region59: #{tpu_custom_call.1} parent=51 // loop_exit
                _
            $region52: #{tpu_custom_call.1} parent=43 // pred_fallthru
              _
          $region44: #{tpu_custom_call.1} parent=39 // pred_fallthru
            _
          %328 = vnop
        $region40: #{tpu_custom_call.1} parent=31 // pred_fallthru
          _
        // Predicated region
        $region78: #{tpu_custom_call.1} parent=31 // pred_check
          %p329 = pneg %p185
        $region79: #{tpu_custom_call.1} parent=31 // pred_check_branch
          %331 = sbr.rel (%p329) target = $region81
        $region80: #{tpu_custom_call.1} parent=31 // pred_region
          %p332 = scmp.lt.s32.totalorder %s25, 2
          %s333 = scalar_select %p332, %s25, 2
          %s334 = scalar_lea.vmem %s6, %s333
        $region81: #{tpu_custom_call.1} parent=31 // pred_fallthru
          _
      $region32: #{tpu_custom_call.1} parent=5 // pred_fallthru
        _
      %p335 = scmp.le.s32.totalorder 1, %s17
      %p336 = scmp.lt.s32.totalorder %s17, 10
      %p337 = pnand %p335, %p336
      %p338 = pneg %p337
      // Predicated region
      $region82: #{tpu_custom_call.1} parent=5 // pred_check
        _
      $region83: #{tpu_custom_call.1} parent=5 // pred_check_branch
        %340 = sbr.rel (%p337) target = $region85
      $region84: #{tpu_custom_call.1} parent=5 // pred_region
        %s341 = ssub.s32 %s17, 1
        // Predicated region
        $region86: #{tpu_custom_call.1} parent=84 // pred_check
          %p342 = pneg %p76
        $region87: #{tpu_custom_call.1} parent=84 // pred_check_branch
          %344 = sbr.rel (%p342) target = $region89
        $region88: #{tpu_custom_call.1} parent=84 // pred_region
          %345 = dma.done [#allocation4], 256
        $region89: #{tpu_custom_call.1} parent=84 // pred_fallthru
          _
        %s346 = sand.u32 %s152, 1
        %s347 = sand.u32 %s152, 1
        %s348 = smul.addr %s347, 16
        %s349 = scalar_lea.vmem [#allocation6], %s348
        // Predicated region
        $region90: #{tpu_custom_call.1} parent=84 // pred_check
          %p350 = pneg %p165
        $region91: #{tpu_custom_call.1} parent=84 // pred_check_branch
          %352 = sbr.rel (%p350) target = $region93
        $region92: #{tpu_custom_call.1} parent=84 // pred_region
          _
        $region93: #{tpu_custom_call.1} parent=84 // pred_fallthru
          _
        %s353 = smul.u32 2, %s26
        %p354 = scmp.lt.s32.totalorder %s353, 5
        %s355 = scalar_select %p354, %s353, 5
        %s356 = smul.addr %s355, 4
        %s357 = scalar_lea.vmem %s0, %s356
        %p358 = pneg %p55
        %p359 = pneg %p52
        %p360 = pneg %p76
        %p361 = pneg %p73
        %p362 = pneg %p97
        %p363 = pneg %p94
        %p364 = pneg %p118
        %p365 = pneg %p115
        %p366 = pneg %p139
        %p367 = pneg %p136
        %s368 = sand.u32 %s152, 1
        %s369 = sand.u32 %s152, 1
        %s370 = smul.addr %s369, 16
        %s371 = scalar_lea.vmem [#allocation6], %s370
        %p372 = pneg %p165
        %p373 = pneg %p162
        %p374 = scmp.lt.s32.totalorder %s27, 2
        %s375 = scalar_select %p374, %s27, 2
        %s376 = scalar_lea.vmem %s6, %s375
        %p377 = pneg %p191
        %p378 = pneg %p188
        %p379 = pneg %p219
        %p380 = pneg %p216
        %s381 = sand.u32 %s206, 1
        %s382 = scalar_lea.sflag [#allocation5], %s381
        %s383 = sand.u32 %s206, 1
        %s384 = smul.addr %s383, 16
        %s385 = scalar_lea.vmem [#allocation7], %s384
        %s386 = smul.u32 2, %s26
        %p387 = scmp.lt.s32.totalorder %s386, 5
        %s388 = scalar_select %p387, %s386, 5
        %s389 = smul.addr %s388, 4
        %s390 = scalar_lea.vmem %s0, %s389
        %s391 = smul.u32 2, %s26
        %p392 = scmp.lt.s32.totalorder %s27, 2
        %s393 = scalar_select %p392, %s27, 2
        %s394 = scalar_lea.vmem %s6, %s393
        %s395 = smul.u32 2, %s26
        %p397 = scmp.eq.s32.totalorder %s27, 0
        // Predicated region
        $region94: #{tpu_custom_call.1} parent=84 // pred_check
          %p398 = pneg %p397
        $region95: #{tpu_custom_call.1} parent=84 // pred_check_branch
          %400 = sbr.rel (%p398) target = $region97
        $region96: #{tpu_custom_call.1} parent=84 // pred_region
          %v401 = vld [vmem:[%s390] sm:$0xf]
          %v402 = vld [vmem:[%s390 + $0x4] sm:$0xf]
          %v403 = vld [vmem:[#allocation3] sm:$0xf]
          %v404 = vld [vmem:[#allocation3 + $0x4] sm:$0xf]
          %v405 = vld [vmem:[#allocation3 + $0x8] sm:$0xf]
          %v406 = vld [vmem:[#allocation3 + $0xc] sm:$0xf]
          %v407 = vld [vmem:[%s2] sm:$0x1]
          %v409 = vlaneseq
          %v410 = vshrl.u32 %v409, 7
          %v411 = vsub.s32 0, %v410
          %v412 = vrot.slane %v407, %v411
          %v416 = vunpack.c.l.b16 %v401
          %v417 = vunpack.c.l.b16 %v402
          %v418 = vpack.c.b16 %v417, %v416
          %v423 = vunpack.c.l.b16 %v403
          %v424 = vunpack.c.l.b16 %v404
          %v425 = vunpack.c.l.b16 %v405
          %v426 = vunpack.c.l.b16 %v406
          %v427 = vpack.c.b16 %v424, %v423
          %v428 = vpack.c.b16 %v426, %v425
          %vm431 = vcmask 261120
          %v433 = vsel %vm431, %v418, 0
          %435 = vmatprep.subr.bf16.mxu0 0
          %436 = vmatpush1.bf16.msra.mxu0 %v427
          %437 = vmatprep.subr.bf16.mxu0 0
          %438 = vmatpush1.bf16.msra.mxu0 %v428
          %439 = vmatprep.subr.bf16.mxu0 0
          %440 = vmatpush1.bf16.msra.mxu0 0
          %441 = vmatprep.subr.bf16.mxu0 0
          %442 = vmatpush1.bf16.msra.mxu0 0
          %443 = vmatprep.subr.bf16.mxu0 0
          %444 = vmatpush1.bf16.msra.mxu0 0
          %445 = vmatprep.subr.bf16.mxu0 0
          %446 = vmatpush1.bf16.msra.mxu0 0
          %447 = vmatprep.subr.bf16.mxu0 0
          %448 = vmatpush1.bf16.msra.mxu0 0
          %449 = vmatprep.subr.bf16.mxu0 0
          %450 = vmatpush1.bf16.msra.mxu0 0
          %451 = vmatprep.subr.bf16.mxu0 0
          %452 = vmatpush1.bf16.msra.mxu0 0
          %453 = vmatprep.subr.bf16.mxu0 0
          %454 = vmatpush1.bf16.msra.mxu0 0
          %455 = vmatprep.subr.bf16.mxu0 0
          %456 = vmatpush1.bf16.msra.mxu0 0
          %457 = vmatprep.subr.bf16.mxu0 0
          %458 = vmatpush1.bf16.msra.mxu0 0
          %459 = vmatprep.subr.bf16.mxu0 0
          %460 = vmatpush1.bf16.msra.mxu0 0
          %461 = vmatprep.subr.bf16.mxu0 0
          %462 = vmatpush1.bf16.msra.mxu0 0
          %463 = vmatprep.subr.bf16.mxu0 0
          %464 = vmatpush1.bf16.msra.mxu0 0
          %465 = vmatprep.subr.bf16.mxu0 0
          %466 = vmatpush1.bf16.msra.mxu0 0
          %467 = vmatprep.mubr.bf16.mxu0 0
          %468 = vmatmul.mubr.bf16.gmra.mrb[0].mxu0 %v433
          %v469 = vpop.f32.mrb[0].mxu0
          %v470 = vadd.f32 %v412, %v469
          %v471 = vpop.f32.mrb[0].mxu0
          %v472 = vpop.f32.mrb[0].mxu0
          %v473 = vadd.f32 %v412, %v472
          %v474 = vpop.f32.mrb[0].mxu0
          %475 = vdwg.mxu0
          %v476 = vmul.f32 %v470, 0.5
          %v477 = vmul.f32 %v473, 0.5
          %v478 = vmul.f32 %v470, 0.70710677
          %v479 = vmul.f32 %v473, 0.70710677
          %v480 = verf.f32.pop %v478
          %v481 = verf.f32.pop %v479
          %v482 = vadd.f32 %v480, 1.0
          %v483 = vadd.f32 %v481, 1.0
          %v484 = vmul.f32 %v476, %v482
          %v485 = vmul.f32 %v477, %v483
          %v486 = vsel %vm431, %v484, 0.0
          %487 = vadd.xlane.f32.xlu0 %v486
          %v488 = vpop.xlane.xlu0 %487
          %v489 = vsel %vm431, %v485, 0.0
          %490 = vadd.xlane.f32.xlu0 %v489
          %v491 = vpop.xlane.xlu0 %490
          %v492 = vrcp.pop 32.0
          %v493 = vmul.f32 %v488, %v492
          %v494 = vmul.f32 %v491, %v492
          %v495 = vsub.f32 %v484, %v493
          %v496 = vsub.f32 %v485, %v494
          %v497 = vmul.f32 %v495, %v495
          %v498 = vmul.f32 %v496, %v496
          %v499 = vsel %vm431, %v497, 0.0
          %500 = vadd.xlane.f32.xlu0 %v499
          %v501 = vpop.xlane.xlu0 %500
          %v502 = vsel %vm431, %v498, 0.0
          %503 = vadd.xlane.f32.xlu0 %v502
          %v504 = vpop.xlane.xlu0 %503
          %v505 = vmul.f32 %v501, %v492
          %v506 = vmul.f32 %v504, %v492
          %v507 = vadd.f32 %v505, 1e-12
          %v508 = vadd.f32 %v506, 1e-12
          %v509 = vrsqrt.pop %v507
          %v510 = vrsqrt.pop %v508
          %v511 = vmul.f32 %v495, %v509
          %v512 = vmul.f32 %v496, %v510
          %v513 = vld [vmem:[%s3] sm:$0x1]
          %v515 = vlaneseq
          %v516 = vshrl.u32 %v515, 7
          %v517 = vsub.s32 0, %v516
          %v518 = vrot.slane %v513, %v517
          %v520 = vmul.f32 %v511, %v518
          %v521 = vmul.f32 %v512, %v518
          %v522 = vld [vmem:[%s4] sm:$0x1]
          %v524 = vlaneseq
          %v525 = vshrl.u32 %v524, 7
          %v526 = vsub.s32 0, %v525
          %v527 = vrot.slane %v522, %v526
          %v529 = vadd.f32 %v520, %v527
          %v530 = vadd.f32 %v521, %v527
          %v531 = vpack.c.bf16 %v530, %v529
          %532 = vst.msk [vmem:[#allocation2] sm:$0xff] %vm431, %v531
        $region97: #{tpu_custom_call.1} parent=84 // pred_fallthru
          _
        %v533 = vld [vmem:[#allocation2] sm:$0xff]
        %v534 = vld [vmem:[%s349] sm:$0xf]
        %v535 = vld [vmem:[%s349 + $0x4] sm:$0xf]
        %v536 = vld [vmem:[%s349 + $0x8] sm:$0xf]
        %v537 = vld [vmem:[%s349 + $0xc] sm:$0xf]
        %v538 = vld [vmem:[%s394] sm:$0x1]
        %v540 = vlaneseq
        %v541 = vshrl.u32 %v540, 7
        %v542 = vsub.s32 0, %v541
        %v543 = vrot.slane %v538, %v542
        %v549 = vunpack.c.l.b16 %v534
        %v550 = vunpack.c.l.b16 %v535
        %v551 = vunpack.c.l.b16 %v536
        %v552 = vunpack.c.l.b16 %v537
        %v553 = vpack.c.b16 %v550, %v549
        %v554 = vpack.c.b16 %v552, %v551
        %vm557 = vcmask 261120
        %v559 = vsel %vm557, %v533, 0
        %561 = vmatprep.subr.bf16.mxu0 0
        %562 = vmatpush1.bf16.msra.mxu0 %v553
        %563 = vmatprep.subr.bf16.mxu0 0
        %564 = vmatpush1.bf16.msra.mxu0 %v554
        %565 = vmatprep.subr.bf16.mxu0 0
        %566 = vmatpush1.bf16.msra.mxu0 0
        %567 = vmatprep.subr.bf16.mxu0 0
        %568 = vmatpush1.bf16.msra.mxu0 0
        %569 = vmatprep.subr.bf16.mxu0 0
        %570 = vmatpush1.bf16.msra.mxu0 0
        %571 = vmatprep.subr.bf16.mxu0 0
        %572 = vmatpush1.bf16.msra.mxu0 0
        %573 = vmatprep.subr.bf16.mxu0 0
        %574 = vmatpush1.bf16.msra.mxu0 0
        %575 = vmatprep.subr.bf16.mxu0 0
        %576 = vmatpush1.bf16.msra.mxu0 0
        %577 = vmatprep.subr.bf16.mxu0 0
        %578 = vmatpush1.bf16.msra.mxu0 0
        %579 = vmatprep.subr.bf16.mxu0 0
        %580 = vmatpush1.bf16.msra.mxu0 0
        %581 = vmatprep.subr.bf16.mxu0 0
        %582 = vmatpush1.bf16.msra.mxu0 0
        %583 = vmatprep.subr.bf16.mxu0 0
        %584 = vmatpush1.bf16.msra.mxu0 0
        %585 = vmatprep.subr.bf16.mxu0 0
        %586 = vmatpush1.bf16.msra.mxu0 0
        %587 = vmatprep.subr.bf16.mxu0 0
        %588 = vmatpush1.bf16.msra.mxu0 0
        %589 = vmatprep.subr.bf16.mxu0 0
        %590 = vmatpush1.bf16.msra.mxu0 0
        %591 = vmatprep.subr.bf16.mxu0 0
        %592 = vmatpush1.bf16.msra.mxu0 0
        %593 = vmatprep.mubr.bf16.mxu0 0
        %594 = vmatmul.mubr.bf16.gmra.mrb[0].mxu0 %v559
        %v595 = vpop.f32.mrb[0].mxu0
        %v596 = vadd.f32 %v543, %v595
        %v597 = vpop.f32.mrb[0].mxu0
        %v598 = vpop.f32.mrb[0].mxu0
        %v599 = vadd.f32 %v543, %v598
        %v600 = vpop.f32.mrb[0].mxu0
        %601 = vdwg.mxu0
        %602 = vst [vmem:[%s385] sm:$0xff] %v596
        %603 = vst [vmem:[%s385 + $0x8] sm:$0xff] %v599
        %s604 = sand.u32 %s206, 1
        %s605 = scalar_lea.sflag [#allocation5], %s604
        %s606 = sand.u32 %s206, 1
        %s607 = smul.addr %s606, 16
        %s608 = scalar_lea.vmem [#allocation7], %s607
        // Predicated region
        $region98: #{tpu_custom_call.1} parent=84 // pred_check
          %p609 = pneg %p216
        $region99: #{tpu_custom_call.1} parent=84 // pred_check_branch
          %611 = sbr.rel (%p609) target = $region101
        $region100: #{tpu_custom_call.1} parent=84 // pred_region
          %s612 = smul.u32 2, %s26
          %s614 = ssub.s32 256, 256
          %615 = vsyncadd %s605, %s614
          %s616 = smul.addr %s612, 3
          %s617 = sadd.s32 %s27, %s616
          %s618 = smul.addr %s617, 128
          %s619 = scalar_lea.hbm %s7, %s618
          %s620 = sshll.u32 %s608, 4
          %s621 = int_to_ptr.vmem [resolvable:$true] %s620
          %626 = dma.vmem_to_hbm [thread:$0]  %s621, 256, %s619, %s605, 128, 384, 8
        $region101: #{tpu_custom_call.1} parent=84 // pred_fallthru
          _
      $region85: #{tpu_custom_call.1} parent=5 // pred_fallthru
        _
      %p627 = scmp.le.s32.totalorder 2, %s17
      // Predicated region
      $region102: #{tpu_custom_call.1} parent=5 // pred_check
        %p628 = pneg %p627
      $region103: #{tpu_custom_call.1} parent=5 // pred_check_branch
        %630 = sbr.rel (%p628) target = $region105
      $region104: #{tpu_custom_call.1} parent=5 // pred_region
        %s631 = ssub.s32 %s17, 2
        // Predicated region
        $region106: #{tpu_custom_call.1} parent=104 // pred_check
          %p632 = pneg %p222
        $region107: #{tpu_custom_call.1} parent=104 // pred_check_branch
          %634 = sbr.rel (%p632) target = $region109
        $region108: #{tpu_custom_call.1} parent=104 // pred_region
          %s635 = sand.u32 %s207, 1
          %s636 = scalar_lea.sflag [#allocation5], %s635
          %s637 = sand.u32 %s207, 1
          %s638 = smul.addr %s637, 16
          %s639 = scalar_lea.vmem [#allocation7], %s638
          %640 = dma.done %s636, 256
        $region109: #{tpu_custom_call.1} parent=104 // pred_fallthru
          _
      $region105: #{tpu_custom_call.1} parent=5 // pred_fallthru
        _
    $region6: #{tpu_custom_call.1} parent=1 // loop_footer
      %s21 = sadd.s32 1, %s17
    $region7: #{tpu_custom_call.1} parent=1 // loop_footer_branch
      %16 = sbr.rel target = $region3
    $region8: #{tpu_custom_call.1} parent=1 // loop_exit
      _
    %641 = vsyncpa [#allocation4], 1
    %s642 = scalar_lea.sflag [#allocation4], 1
    %643 = vsyncpa %s642, 1
    %644 = vsyncpa [#allocation5], 1
    %s645 = scalar_lea.sflag [#allocation5], 1
    %646 = vsyncpa %s645, 1

</llo_original>
